<compile_context>
chip_gen: v6e
topology: v6e:2x2x1
jax: 0.10.0
libtpu: 0.0.40
codegen_flags: <defaults>
</compile_context>

<pallas_src>
import math

import jax
import jax.numpy as jnp
from jax.experimental import pallas as pl
from jax.experimental.pallas import tpu as pltpu


# ---------------------------------------------------------------------------
# GroupWiseLinear head
# ---------------------------------------------------------------------------
def _gwl_kernel(x_ref, w_ref, b_ref, o_ref):
    # x_ref: (tB, C, H)   w_ref: (1, C, H)   b_ref: (1, C)   o_ref: (tB, C)
    tb, c, h = x_ref.shape
    if h > 128 and h % 128 == 0:
        # Chunked accumulation over 128-lane slabs: keeps the f32 intermediate
        # at (tB, C, 128) (matters for bf16 inputs) and leaves a single
        # cross-lane (XLU) reduce at the end instead of one over all H lanes.
        acc = jnp.zeros((tb, c, 128), jnp.float32)
        for k in range(h // 128):
            lo, hi = k * 128, (k + 1) * 128
            acc = acc + (x_ref[:, :, lo:hi].astype(jnp.float32)
                         * w_ref[:, :, lo:hi].astype(jnp.float32))
        s = jnp.sum(acc, axis=-1)                      # (tB, C), one XLU reduce
    else:
        p = x_ref[...].astype(jnp.float32) * w_ref[...].astype(jnp.float32)
        s = jnp.sum(p, axis=-1)                        # (tB, C)
    o_ref[...] = (s + b_ref[...].astype(jnp.float32)).astype(o_ref.dtype)
    # TODO(synk): a lane-dense (C-on-sublanes, B-on-lanes) output layout would
    # avoid masked stores for small num_class; output traffic is only 1/H of
    # the x reads, so the natural (tB, C) layout is kept.


def _choose_tile_b(B, C, H, itemsize, target_bytes):
    """Largest batch tile whose x block stays around target_bytes (VMEM friendly)."""
    row_bytes = max(1, C * H * itemsize)
    tb = target_bytes // row_bytes
    if tb >= B:
        return B                    # full array as one block (always legal)
    tb = max(8, (tb // 8) * 8)      # sublane-aligned output block rows
    return min(tb, B)


def group_wise_linear(x, W, b, *, tile_b=None, target_tile_bytes=4 << 20):
    """x: (B, C, H), W: (1, C, H), b: (1, C) -> (B, C)."""
    B, C, H = x.shape
    assert W.shape == (1, C, H) and b.shape == (1, C)
    itemsize = jnp.dtype(x.dtype).itemsize
    tB = tile_b if tile_b is not None else _choose_tile_b(
        B, C, H, itemsize, target_tile_bytes)
    tB = min(tB, B)
    if tB != B and tB % 8 != 0:
        tB = max(8, (tB // 8) * 8)  # keep the (tB, C) output block legal

    grid = (pl.cdiv(B, tB),)
    return pl.pallas_call(
        _gwl_kernel,
        out_shape=jax.ShapeDtypeStruct((B, C), x.dtype),
        grid=grid,
        in_specs=[
            pl.BlockSpec((tB, C, H), lambda i: (i, 0, 0)),   # streamed over batch
            pl.BlockSpec((1, C, H), lambda i: (0, 0, 0)),    # resident weights
            pl.BlockSpec((1, C), lambda i: (0, 0)),          # resident bias
        ],
        out_specs=pl.BlockSpec((tB, C), lambda i: (i, 0)),
        compiler_params=pltpu.CompilerParams(
            dimension_semantics=("parallel",),   # megacore sharding on v7x
            vmem_limit_bytes=32 << 20,           # lift v5e's 16 MiB default, safe on all gens
        ),
    )(x, W, b)


# ---------------------------------------------------------------------------
# CNN_Encoder: 5 x [Conv1d(k=3, same padding) + residual + tanh]
# ---------------------------------------------------------------------------
def _cnn_encoder_kernel(x_ref, w_ref, b_ref, o_ref):
    # x_ref: (1, L, D)  w_ref: (NL, 3, D, D)  b_ref: (NL, 1, D)  o_ref: (1, L, D)
    h = x_ref[0].astype(jnp.float32)                         # (L, D)
    seq_len, d = h.shape
    zero_row = jnp.zeros((1, d), jnp.float32)
    n_layers = w_ref.shape[0]
    for layer in range(n_layers):                            # static unroll (5 layers)
        w_l = w_ref[layer].astype(jnp.float32)               # (3, D_in, D_out) taps
        bias = b_ref[layer].astype(jnp.float32)              # (1, D)
        # zero-padded shifts along the sequence (sublane) axis -> "same" conv
        h_prev = jnp.concatenate([zero_row, h[:seq_len - 1, :]], axis=0)
        h_next = jnp.concatenate([h[1:, :], zero_row], axis=0)
        y = jnp.dot(h_prev, w_l[0], preferred_element_type=jnp.float32)
        y = y + jnp.dot(h, w_l[1], preferred_element_type=jnp.float32)
        y = y + jnp.dot(h_next, w_l[2], preferred_element_type=jnp.float32)
        h = jnp.tanh(y + bias + h)                           # conv + bias + residual
    o_ref[0] = h.astype(o_ref.dtype)
    # TODO(synk): nn.Dropout at the head of CNN_Encoder.forward is identity at
    # inference and is intentionally omitted.


def cnn_encoder(src, conv_w, conv_b):
    """src: (B, L, D); conv_w: (NL, D_out, D_in, 3) (PyTorch layout); conv_b: (NL, D_out)."""
    B, L, D = src.shape
    NL, Do, Di, K = conv_w.shape
    assert Do == D and Di == D and K == 3 and conv_b.shape == (NL, D)
    w_k = jnp.transpose(conv_w, (0, 3, 2, 1))   # (NL, 3, D_in, D_out) per-tap matmul weights
    b_k = conv_b.reshape(NL, 1, D)
    return pl.pallas_call(
        _cnn_encoder_kernel,
        out_shape=jax.ShapeDtypeStruct((B, L, D), src.dtype),
        grid=(B,),
        in_specs=[
            pl.BlockSpec((1, L, D), lambda i: (i, 0, 0)),        # one sequence per step
            pl.BlockSpec((NL, 3, D, D), lambda i: (0, 0, 0, 0)),  # resident conv weights
            pl.BlockSpec((NL, 1, D), lambda i: (0, 0, 0)),        # resident conv biases
        ],
        out_specs=pl.BlockSpec((1, L, D), lambda i: (i, 0, 0)),
        compiler_params=pltpu.CompilerParams(
            dimension_semantics=("parallel",),
            vmem_limit_bytes=32 << 20,
        ),
    )(src, w_k, b_k)


def cnn_encoder_ref(src, conv_w, conv_b):
    """Pure-JAX reference using lax conv in PyTorch NCL layout."""
    h = jnp.transpose(src, (0, 2, 1))          # (B, D, L)
    for i in range(conv_w.shape[0]):
        y = jax.lax.conv_general_dilated(
            h, conv_w[i], window_strides=(1,), padding=((1, 1),),
            dimension_numbers=("NCH", "OIH", "NCH"))
        y = y + conv_b[i][None, :, None]
        h = jnp.tanh(y + h)
    return jnp.transpose(h, (0, 2, 1))


# ---------------------------------------------------------------------------
# Parameter init (matches the PyTorch modules' reset/default init, deterministic)
# ---------------------------------------------------------------------------
def init_gwl_params(key, num_class, hidden_dim, dtype=jnp.float32):
    stdv = 1.0 / math.sqrt(hidden_dim)
    kw, kb = jax.random.split(key)
    W = jax.random.uniform(kw, (1, num_class, hidden_dim),
                           minval=-stdv, maxval=stdv, dtype=dtype)
    b = jax.random.uniform(kb, (1, num_class),
                           minval=-stdv, maxval=stdv, dtype=dtype)
    return W, b


def init_cnn_params(key, hid_dim, kernel_size=3, num_layers=5, dtype=jnp.float32):
    bound = 1.0 / math.sqrt(hid_dim * kernel_size)
    kw, kb = jax.random.split(key)
    w = jax.random.uniform(kw, (num_layers, hid_dim, hid_dim, kernel_size),
                           minval=-bound, maxval=bound, dtype=dtype)
    b = jax.random.uniform(kb, (num_layers, hid_dim),
                           minval=-bound, maxval=bound, dtype=dtype)
    return w, b


if __name__ == "__main__":
    key = jax.random.PRNGKey(0)

    # --- CNN_Encoder: B=2, L=16, D=128 (hid_dim=128 as in Electra) ------------
    B, L, D = 2, 16, 128
    key, kx, kw = jax.random.split(key, 3)
    src = jax.random.normal(kx, (B, L, D), dtype=jnp.float32)
    conv_w, conv_b = init_cnn_params(kw, hid_dim=D, kernel_size=3, num_layers=5)
    cnn_out = jax.block_until_ready(cnn_encoder(src, conv_w, conv_b))
    cnn_ref = cnn_encoder_ref(src, conv_w, conv_b)
    assert cnn_out.shape == (B, L, D)
    assert jnp.allclose(cnn_out, cnn_ref, atol=1e-4, rtol=1e-4), "CNN mismatch vs conv ref"

    # --- GroupWiseLinear: small demo shapes (hid_dim=128 head) ----------------
    NUM_CLASS, HIDDEN_DIM = 8, 128
    key, kx1, kp1 = jax.random.split(key, 3)
    x = jax.random.normal(kx1, (B, NUM_CLASS, HIDDEN_DIM), dtype=jnp.float32)
    W, b = init_gwl_params(kp1, NUM_CLASS, HIDDEN_DIM)
    out = jax.block_until_ready(group_wise_linear(x, W, b))
    ref = jnp.sum(W * x, axis=-1) + b
    assert out.shape == (B, NUM_CLASS)
    assert jnp.allclose(out, ref, atol=1e-5, rtol=1e-5), "f32 mismatch vs reference"

    # --- multi-block grid + chunked-H reduction path (H > 128, H % 128 == 0) --
    B2, C2, H2 = 24, 8, 256
    key, kx2, kp2 = jax.random.split(key, 3)
    x2 = jax.random.normal(kx2, (B2, C2, H2), dtype=jnp.float32)
    W2, b2 = init_gwl_params(kp2, C2, H2)
    out2 = jax.block_until_ready(group_wise_linear(x2, W2, b2, tile_b=8))
    ref2 = jnp.sum(W2 * x2, axis=-1) + b2
    assert jnp.allclose(out2, ref2, atol=1e-4, rtol=1e-4), "tiled-grid mismatch"

    # --- bf16 activations: f32 accumulation inside the kernel -----------------
    x3 = x2.astype(jnp.bfloat16)
    out3 = jax.block_until_ready(group_wise_linear(x3, W2, b2, tile_b=8))
    ref3 = jnp.sum(W2 * x3.astype(jnp.float32), axis=-1) + b2
    assert jnp.allclose(out3.astype(jnp.float32), ref3, atol=3e-2, rtol=3e-2), \
        "bf16 mismatch vs f32-accumulated reference"

    print("KERNEL_OK")
</pallas_src>

<mosaic_0001>
module attributes {stable_mosaic.version = 11 : i64} {
  func.func @_cnn_encoder_kernel(%arg0: i32, %arg1: memref<1x16x128xf32, #tpu.memory_space<vmem>>, %arg2: memref<5x3x128x128xf32, #tpu.memory_space<vmem>>, %arg3: memref<5x1x128xf32, #tpu.memory_space<vmem>>, %arg4: memref<1x16x128xf32, #tpu.memory_space<vmem>>) attributes {dimension_semantics = [#tpu.dimension_semantics<parallel>], iteration_bounds = array<i64: 2>, scalar_prefetch = 0 : i64, scratch_operands = 0 : i64, tpu.core_type = #tpu.core_type<tc>, window_params = [{transform_indices = @transform_0, window_bounds = array<i64: 1, 16, 128>}, {pipeline_mode = #tpu.pipeline_mode<synchronous>, transform_indices = @transform_1, window_bounds = array<i64: 5, 3, 128, 128>}, {pipeline_mode = #tpu.pipeline_mode<synchronous>, transform_indices = @transform_2, window_bounds = array<i64: 5, 1, 128>}, {transform_indices = @transform_3, window_bounds = array<i64: 1, 16, 128>}]} {
    %c0 = arith.constant 0 : index
    %c0_0 = arith.constant 0 : index
    %c0_1 = arith.constant 0 : index
    %0 = vector.load %arg1[%c0, %c0_0, %c0_1] : memref<1x16x128xf32, #tpu.memory_space<vmem>>, vector<1x16x128xf32>
    %1 = vector.shape_cast %0 : vector<1x16x128xf32> to vector<16x128xf32>
    %cst = arith.constant 0.000000e+00 : f32
    %2 = vector.broadcast %cst : f32 to vector<1x128xf32>
    %c0_2 = arith.constant 0 : index
    %c0_3 = arith.constant 0 : index
    %c0_4 = arith.constant 0 : index
    %c0_5 = arith.constant 0 : index
    %3 = vector.load %arg2[%c0_2, %c0_3, %c0_4, %c0_5] : memref<5x3x128x128xf32, #tpu.memory_space<vmem>>, vector<1x3x128x128xf32>
    %4 = vector.shape_cast %3 : vector<1x3x128x128xf32> to vector<3x128x128xf32>
    %c0_6 = arith.constant 0 : index
    %c0_7 = arith.constant 0 : index
    %c0_8 = arith.constant 0 : index
    %5 = vector.load %arg3[%c0_6, %c0_7, %c0_8] : memref<5x1x128xf32, #tpu.memory_space<vmem>>, vector<1x1x128xf32>
    %6 = vector.shape_cast %5 : vector<1x1x128xf32> to vector<1x128xf32>
    %7 = vector.extract_strided_slice %1 {offsets = [0, 0], sizes = [15, 128], strides = [1, 1]} : vector<16x128xf32> to vector<15x128xf32>
    %8 = tpu.concatenate %2, %7 in 0 : vector<1x128xf32>, vector<15x128xf32> -> vector<16x128xf32>
    %9 = vector.extract_strided_slice %1 {offsets = [1, 0], sizes = [15, 128], strides = [1, 1]} : vector<16x128xf32> to vector<15x128xf32>
    %10 = tpu.concatenate %9, %2 in 0 : vector<15x128xf32>, vector<1x128xf32> -> vector<16x128xf32>
    %11 = vector.extract_strided_slice %4 {offsets = [0, 0, 0], sizes = [1, 128, 128], strides = [1, 1, 1]} : vector<3x128x128xf32> to vector<1x128x128xf32>
    %12 = vector.shape_cast %11 : vector<1x128x128xf32> to vector<128x128xf32>
    %cst_9 = arith.constant dense<0.000000e+00> : vector<16x128xf32>
    %13 = tpu.matmul %8, %12, %cst_9 {dimension_numbers = #tpu.dot_dimension_numbers<[1], [0], [0], [1], [0, 0, 1, 1], [], []>} : vector<16x128xf32>, vector<128x128xf32>, vector<16x128xf32> -> vector<16x128xf32>
    %14 = vector.extract_strided_slice %4 {offsets = [1, 0, 0], sizes = [1, 128, 128], strides = [1, 1, 1]} : vector<3x128x128xf32> to vector<1x128x128xf32>
    %15 = vector.shape_cast %14 : vector<1x128x128xf32> to vector<128x128xf32>
    %cst_10 = arith.constant dense<0.000000e+00> : vector<16x128xf32>
    %16 = tpu.matmul %1, %15, %cst_10 {dimension_numbers = #tpu.dot_dimension_numbers<[1], [0], [0], [1], [0, 0, 1, 1], [], []>} : vector<16x128xf32>, vector<128x128xf32>, vector<16x128xf32> -> vector<16x128xf32>
    %17 = arith.addf %13, %16 : vector<16x128xf32>
    %18 = vector.extract_strided_slice %4 {offsets = [2, 0, 0], sizes = [1, 128, 128], strides = [1, 1, 1]} : vector<3x128x128xf32> to vector<1x128x128xf32>
    %19 = vector.shape_cast %18 : vector<1x128x128xf32> to vector<128x128xf32>
    %cst_11 = arith.constant dense<0.000000e+00> : vector<16x128xf32>
    %20 = tpu.matmul %10, %19, %cst_11 {dimension_numbers = #tpu.dot_dimension_numbers<[1], [0], [0], [1], [0, 0, 1, 1], [], []>} : vector<16x128xf32>, vector<128x128xf32>, vector<16x128xf32> -> vector<16x128xf32>
    %21 = arith.addf %17, %20 : vector<16x128xf32>
    %22 = vector.broadcast %6 : vector<1x128xf32> to vector<16x128xf32>
    %23 = arith.addf %21, %22 : vector<16x128xf32>
    %24 = arith.addf %23, %1 : vector<16x128xf32>
    %25 = math.tanh %24 : vector<16x128xf32>
    %c1 = arith.constant 1 : index
    %c0_12 = arith.constant 0 : index
    %c0_13 = arith.constant 0 : index
    %c0_14 = arith.constant 0 : index
    %26 = vector.load %arg2[%c1, %c0_12, %c0_13, %c0_14] : memref<5x3x128x128xf32, #tpu.memory_space<vmem>>, vector<1x3x128x128xf32>
    %27 = vector.shape_cast %26 : vector<1x3x128x128xf32> to vector<3x128x128xf32>
    %c1_15 = arith.constant 1 : index
    %c0_16 = arith.constant 0 : index
    %c0_17 = arith.constant 0 : index
    %28 = vector.load %arg3[%c1_15, %c0_16, %c0_17] : memref<5x1x128xf32, #tpu.memory_space<vmem>>, vector<1x1x128xf32>
    %29 = vector.shape_cast %28 : vector<1x1x128xf32> to vector<1x128xf32>
    %30 = vector.extract_strided_slice %25 {offsets = [0, 0], sizes = [15, 128], strides = [1, 1]} : vector<16x128xf32> to vector<15x128xf32>
    %31 = tpu.concatenate %2, %30 in 0 : vector<1x128xf32>, vector<15x128xf32> -> vector<16x128xf32>
    %32 = vector.extract_strided_slice %25 {offsets = [1, 0], sizes = [15, 128], strides = [1, 1]} : vector<16x128xf32> to vector<15x128xf32>
    %33 = tpu.concatenate %32, %2 in 0 : vector<15x128xf32>, vector<1x128xf32> -> vector<16x128xf32>
    %34 = vector.extract_strided_slice %27 {offsets = [0, 0, 0], sizes = [1, 128, 128], strides = [1, 1, 1]} : vector<3x128x128xf32> to vector<1x128x128xf32>
    %35 = vector.shape_cast %34 : vector<1x128x128xf32> to vector<128x128xf32>
    %cst_18 = arith.constant dense<0.000000e+00> : vector<16x128xf32>
    %36 = tpu.matmul %31, %35, %cst_18 {dimension_numbers = #tpu.dot_dimension_numbers<[1], [0], [0], [1], [0, 0, 1, 1], [], []>} : vector<16x128xf32>, vector<128x128xf32>, vector<16x128xf32> -> vector<16x128xf32>
    %37 = vector.extract_strided_slice %27 {offsets = [1, 0, 0], sizes = [1, 128, 128], strides = [1, 1, 1]} : vector<3x128x128xf32> to vector<1x128x128xf32>
    %38 = vector.shape_cast %37 : vector<1x128x128xf32> to vector<128x128xf32>
    %cst_19 = arith.constant dense<0.000000e+00> : vector<16x128xf32>
    %39 = tpu.matmul %25, %38, %cst_19 {dimension_numbers = #tpu.dot_dimension_numbers<[1], [0], [0], [1], [0, 0, 1, 1], [], []>} : vector<16x128xf32>, vector<128x128xf32>, vector<16x128xf32> -> vector<16x128xf32>
    %40 = arith.addf %36, %39 : vector<16x128xf32>
    %41 = vector.extract_strided_slice %27 {offsets = [2, 0, 0], sizes = [1, 128, 128], strides = [1, 1, 1]} : vector<3x128x128xf32> to vector<1x128x128xf32>
    %42 = vector.shape_cast %41 : vector<1x128x128xf32> to vector<128x128xf32>
    %cst_20 = arith.constant dense<0.000000e+00> : vector<16x128xf32>
    %43 = tpu.matmul %33, %42, %cst_20 {dimension_numbers = #tpu.dot_dimension_numbers<[1], [0], [0], [1], [0, 0, 1, 1], [], []>} : vector<16x128xf32>, vector<128x128xf32>, vector<16x128xf32> -> vector<16x128xf32>
    %44 = arith.addf %40, %43 : vector<16x128xf32>
    %45 = vector.broadcast %29 : vector<1x128xf32> to vector<16x128xf32>
    %46 = arith.addf %44, %45 : vector<16x128xf32>
    %47 = arith.addf %46, %25 : vector<16x128xf32>
    %48 = math.tanh %47 : vector<16x128xf32>
    %c2 = arith.constant 2 : index
    %c0_21 = arith.constant 0 : index
    %c0_22 = arith.constant 0 : index
    %c0_23 = arith.constant 0 : index
    %49 = vector.load %arg2[%c2, %c0_21, %c0_22, %c0_23] : memref<5x3x128x128xf32, #tpu.memory_space<vmem>>, vector<1x3x128x128xf32>
    %50 = vector.shape_cast %49 : vector<1x3x128x128xf32> to vector<3x128x128xf32>
    %c2_24 = arith.constant 2 : index
    %c0_25 = arith.constant 0 : index
    %c0_26 = arith.constant 0 : index
    %51 = vector.load %arg3[%c2_24, %c0_25, %c0_26] : memref<5x1x128xf32, #tpu.memory_space<vmem>>, vector<1x1x128xf32>
    %52 = vector.shape_cast %51 : vector<1x1x128xf32> to vector<1x128xf32>
    %53 = vector.extract_strided_slice %48 {offsets = [0, 0], sizes = [15, 128], strides = [1, 1]} : vector<16x128xf32> to vector<15x128xf32>
    %54 = tpu.concatenate %2, %53 in 0 : vector<1x128xf32>, vector<15x128xf32> -> vector<16x128xf32>
    %55 = vector.extract_strided_slice %48 {offsets = [1, 0], sizes = [15, 128], strides = [1, 1]} : vector<16x128xf32> to vector<15x128xf32>
    %56 = tpu.concatenate %55, %2 in 0 : vector<15x128xf32>, vector<1x128xf32> -> vector<16x128xf32>
    %57 = vector.extract_strided_slice %50 {offsets = [0, 0, 0], sizes = [1, 128, 128], strides = [1, 1, 1]} : vector<3x128x128xf32> to vector<1x128x128xf32>
    %58 = vector.shape_cast %57 : vector<1x128x128xf32> to vector<128x128xf32>
    %cst_27 = arith.constant dense<0.000000e+00> : vector<16x128xf32>
    %59 = tpu.matmul %54, %58, %cst_27 {dimension_numbers = #tpu.dot_dimension_numbers<[1], [0], [0], [1], [0, 0, 1, 1], [], []>} : vector<16x128xf32>, vector<128x128xf32>, vector<16x128xf32> -> vector<16x128xf32>
    %60 = vector.extract_strided_slice %50 {offsets = [1, 0, 0], sizes = [1, 128, 128], strides = [1, 1, 1]} : vector<3x128x128xf32> to vector<1x128x128xf32>
    %61 = vector.shape_cast %60 : vector<1x128x128xf32> to vector<128x128xf32>
    %cst_28 = arith.constant dense<0.000000e+00> : vector<16x128xf32>
    %62 = tpu.matmul %48, %61, %cst_28 {dimension_numbers = #tpu.dot_dimension_numbers<[1], [0], [0], [1], [0, 0, 1, 1], [], []>} : vector<16x128xf32>, vector<128x128xf32>, vector<16x128xf32> -> vector<16x128xf32>
    %63 = arith.addf %59, %62 : vector<16x128xf32>
    %64 = vector.extract_strided_slice %50 {offsets = [2, 0, 0], sizes = [1, 128, 128], strides = [1, 1, 1]} : vector<3x128x128xf32> to vector<1x128x128xf32>
    %65 = vector.shape_cast %64 : vector<1x128x128xf32> to vector<128x128xf32>
    %cst_29 = arith.constant dense<0.000000e+00> : vector<16x128xf32>
    %66 = tpu.matmul %56, %65, %cst_29 {dimension_numbers = #tpu.dot_dimension_numbers<[1], [0], [0], [1], [0, 0, 1, 1], [], []>} : vector<16x128xf32>, vector<128x128xf32>, vector<16x128xf32> -> vector<16x128xf32>
    %67 = arith.addf %63, %66 : vector<16x128xf32>
    %68 = vector.broadcast %52 : vector<1x128xf32> to vector<16x128xf32>
    %69 = arith.addf %67, %68 : vector<16x128xf32>
    %70 = arith.addf %69, %48 : vector<16x128xf32>
    %71 = math.tanh %70 : vector<16x128xf32>
    %c3 = arith.constant 3 : index
    %c0_30 = arith.constant 0 : index
    %c0_31 = arith.constant 0 : index
    %c0_32 = arith.constant 0 : index
    %72 = vector.load %arg2[%c3, %c0_30, %c0_31, %c0_32] : memref<5x3x128x128xf32, #tpu.memory_space<vmem>>, vector<1x3x128x128xf32>
    %73 = vector.shape_cast %72 : vector<1x3x128x128xf32> to vector<3x128x128xf32>
    %c3_33 = arith.constant 3 : index
    %c0_34 = arith.constant 0 : index
    %c0_35 = arith.constant 0 : index
    %74 = vector.load %arg3[%c3_33, %c0_34, %c0_35] : memref<5x1x128xf32, #tpu.memory_space<vmem>>, vector<1x1x128xf32>
    %75 = vector.shape_cast %74 : vector<1x1x128xf32> to vector<1x128xf32>
    %76 = vector.extract_strided_slice %71 {offsets = [0, 0], sizes = [15, 128], strides = [1, 1]} : vector<16x128xf32> to vector<15x128xf32>
    %77 = tpu.concatenate %2, %76 in 0 : vector<1x128xf32>, vector<15x128xf32> -> vector<16x128xf32>
    %78 = vector.extract_strided_slice %71 {offsets = [1, 0], sizes = [15, 128], strides = [1, 1]} : vector<16x128xf32> to vector<15x128xf32>
    %79 = tpu.concatenate %78, %2 in 0 : vector<15x128xf32>, vector<1x128xf32> -> vector<16x128xf32>
    %80 = vector.extract_strided_slice %73 {offsets = [0, 0, 0], sizes = [1, 128, 128], strides = [1, 1, 1]} : vector<3x128x128xf32> to vector<1x128x128xf32>
    %81 = vector.shape_cast %80 : vector<1x128x128xf32> to vector<128x128xf32>
    %cst_36 = arith.constant dense<0.000000e+00> : vector<16x128xf32>
    %82 = tpu.matmul %77, %81, %cst_36 {dimension_numbers = #tpu.dot_dimension_numbers<[1], [0], [0], [1], [0, 0, 1, 1], [], []>} : vector<16x128xf32>, vector<128x128xf32>, vector<16x128xf32> -> vector<16x128xf32>
    %83 = vector.extract_strided_slice %73 {offsets = [1, 0, 0], sizes = [1, 128, 128], strides = [1, 1, 1]} : vector<3x128x128xf32> to vector<1x128x128xf32>
    %84 = vector.shape_cast %83 : vector<1x128x128xf32> to vector<128x128xf32>
    %cst_37 = arith.constant dense<0.000000e+00> : vector<16x128xf32>
    %85 = tpu.matmul %71, %84, %cst_37 {dimension_numbers = #tpu.dot_dimension_numbers<[1], [0], [0], [1], [0, 0, 1, 1], [], []>} : vector<16x128xf32>, vector<128x128xf32>, vector<16x128xf32> -> vector<16x128xf32>
    %86 = arith.addf %82, %85 : vector<16x128xf32>
    %87 = vector.extract_strided_slice %73 {offsets = [2, 0, 0], sizes = [1, 128, 128], strides = [1, 1, 1]} : vector<3x128x128xf32> to vector<1x128x128xf32>
    %88 = vector.shape_cast %87 : vector<1x128x128xf32> to vector<128x128xf32>
    %cst_38 = arith.constant dense<0.000000e+00> : vector<16x128xf32>
    %89 = tpu.matmul %79, %88, %cst_38 {dimension_numbers = #tpu.dot_dimension_numbers<[1], [0], [0], [1], [0, 0, 1, 1], [], []>} : vector<16x128xf32>, vector<128x128xf32>, vector<16x128xf32> -> vector<16x128xf32>
    %90 = arith.addf %86, %89 : vector<16x128xf32>
    %91 = vector.broadcast %75 : vector<1x128xf32> to vector<16x128xf32>
    %92 = arith.addf %90, %91 : vector<16x128xf32>
    %93 = arith.addf %92, %71 : vector<16x128xf32>
    %94 = math.tanh %93 : vector<16x128xf32>
    %c4 = arith.constant 4 : index
    %c0_39 = arith.constant 0 : index
    %c0_40 = arith.constant 0 : index
    %c0_41 = arith.constant 0 : index
    %95 = vector.load %arg2[%c4, %c0_39, %c0_40, %c0_41] : memref<5x3x128x128xf32, #tpu.memory_space<vmem>>, vector<1x3x128x128xf32>
    %96 = vector.shape_cast %95 : vector<1x3x128x128xf32> to vector<3x128x128xf32>
    %c4_42 = arith.constant 4 : index
    %c0_43 = arith.constant 0 : index
    %c0_44 = arith.constant 0 : index
    %97 = vector.load %arg3[%c4_42, %c0_43, %c0_44] : memref<5x1x128xf32, #tpu.memory_space<vmem>>, vector<1x1x128xf32>
    %98 = vector.shape_cast %97 : vector<1x1x128xf32> to vector<1x128xf32>
    %99 = vector.extract_strided_slice %94 {offsets = [0, 0], sizes = [15, 128], strides = [1, 1]} : vector<16x128xf32> to vector<15x128xf32>
    %100 = tpu.concatenate %2, %99 in 0 : vector<1x128xf32>, vector<15x128xf32> -> vector<16x128xf32>
    %101 = vector.extract_strided_slice %94 {offsets = [1, 0], sizes = [15, 128], strides = [1, 1]} : vector<16x128xf32> to vector<15x128xf32>
    %102 = tpu.concatenate %101, %2 in 0 : vector<15x128xf32>, vector<1x128xf32> -> vector<16x128xf32>
    %103 = vector.extract_strided_slice %96 {offsets = [0, 0, 0], sizes = [1, 128, 128], strides = [1, 1, 1]} : vector<3x128x128xf32> to vector<1x128x128xf32>
    %104 = vector.shape_cast %103 : vector<1x128x128xf32> to vector<128x128xf32>
    %cst_45 = arith.constant dense<0.000000e+00> : vector<16x128xf32>
    %105 = tpu.matmul %100, %104, %cst_45 {dimension_numbers = #tpu.dot_dimension_numbers<[1], [0], [0], [1], [0, 0, 1, 1], [], []>} : vector<16x128xf32>, vector<128x128xf32>, vector<16x128xf32> -> vector<16x128xf32>
    %106 = vector.extract_strided_slice %96 {offsets = [1, 0, 0], sizes = [1, 128, 128], strides = [1, 1, 1]} : vector<3x128x128xf32> to vector<1x128x128xf32>
    %107 = vector.shape_cast %106 : vector<1x128x128xf32> to vector<128x128xf32>
    %cst_46 = arith.constant dense<0.000000e+00> : vector<16x128xf32>
    %108 = tpu.matmul %94, %107, %cst_46 {dimension_numbers = #tpu.dot_dimension_numbers<[1], [0], [0], [1], [0, 0, 1, 1], [], []>} : vector<16x128xf32>, vector<128x128xf32>, vector<16x128xf32> -> vector<16x128xf32>
    %109 = arith.addf %105, %108 : vector<16x128xf32>
    %110 = vector.extract_strided_slice %96 {offsets = [2, 0, 0], sizes = [1, 128, 128], strides = [1, 1, 1]} : vector<3x128x128xf32> to vector<1x128x128xf32>
    %111 = vector.shape_cast %110 : vector<1x128x128xf32> to vector<128x128xf32>
    %cst_47 = arith.constant dense<0.000000e+00> : vector<16x128xf32>
    %112 = tpu.matmul %102, %111, %cst_47 {dimension_numbers = #tpu.dot_dimension_numbers<[1], [0], [0], [1], [0, 0, 1, 1], [], []>} : vector<16x128xf32>, vector<128x128xf32>, vector<16x128xf32> -> vector<16x128xf32>
    %113 = arith.addf %109, %112 : vector<16x128xf32>
    %114 = vector.broadcast %98 : vector<1x128xf32> to vector<16x128xf32>
    %115 = arith.addf %113, %114 : vector<16x128xf32>
    %116 = arith.addf %115, %94 : vector<16x128xf32>
    %117 = math.tanh %116 : vector<16x128xf32>
    %c0_48 = arith.constant 0 : index
    %c0_49 = arith.constant 0 : index
    %c0_50 = arith.constant 0 : index
    %118 = vector.load %arg4[%c0_48, %c0_49, %c0_50] : memref<1x16x128xf32, #tpu.memory_space<vmem>>, vector<1x16x128xf32>
    %119 = vector.shape_cast %118 : vector<1x16x128xf32> to vector<16x128xf32>
    %120 = vector.shape_cast %117 : vector<16x128xf32> to vector<1x16x128xf32>
    tpu.vector_store %arg4[%c0_48, %c0_49, %c0_50], %120 {strides = array<i32>} : memref<1x16x128xf32, #tpu.memory_space<vmem>>, vector<1x16x128xf32>,
    return
  }
  func.func @transform_0(%arg0: i32) -> (i32, i32, i32) {
    %c0_i32 = arith.constant 0 : i32
    %c0_i32_0 = arith.constant 0 : i32
    %c0_i32_1 = arith.constant 0 : i32
    return %arg0, %c0_i32, %c0_i32_0 : i32, i32, i32
  }
  func.func @transform_1(%arg0: i32) -> (i32, i32, i32, i32) {
    %c0_i32 = arith.constant 0 : i32
    %c0_i32_0 = arith.constant 0 : i32
    %c0_i32_1 = arith.constant 0 : i32
    %c0_i32_2 = arith.constant 0 : i32
    %c0_i32_3 = arith.constant 0 : i32
    return %c0_i32, %c0_i32_0, %c0_i32_1, %c0_i32_2 : i32, i32, i32, i32
  }
  func.func @transform_2(%arg0: i32) -> (i32, i32, i32) {
    %c0_i32 = arith.constant 0 : i32
    %c0_i32_0 = arith.constant 0 : i32
    %c0_i32_1 = arith.constant 0 : i32
    %c0_i32_2 = arith.constant 0 : i32
    return %c0_i32, %c0_i32_0, %c0_i32_1 : i32, i32, i32
  }
  func.func @transform_3(%arg0: i32) -> (i32, i32, i32) {
    %c0_i32 = arith.constant 0 : i32
    %c0_i32_0 = arith.constant 0 : i32
    %c0_i32_1 = arith.constant 0 : i32
    return %arg0, %c0_i32, %c0_i32_0 : i32, i32, i32
  }
}

</mosaic_0001>

<llo_original>
// kernel: tpu_custom_call.1
$region0: #{tpu_custom_call.1}
  #allocation0 [shape = 'u32[]', space=smem, size = 0x4, offset = 0x4, fixed_abs, tag = 'smem constant byte address 0x4 - core index']
  #allocation1 [shape = 'u32[144,128]{1,0:T(1,128)}', space=vmem, size = 0x12000, scoped, tag = 'internal scratch']
  %s0 = inlined_call_operand.hbm [shape: f32[2,16,128], index: 0, kind: input, shape index: {}]
  %s1 = inlined_call_operand.hbm [shape: f32[5,3,128,128], index: 1, kind: input, shape index: {}]
  %s2 = inlined_call_operand.hbm [shape: f32[5,1,128], index: 2, kind: input, shape index: {}]
  %s3 = inlined_call_operand.hbm [shape: f32[2,16,128], index: 3, kind: output, shape index: {}]
  %s4 = sld [smem:[#allocation0]]
  $region57: #{tpu_custom_call.1} parent=0
    _
  %s6 = ssub.s32 1, %s4
  %s7 = scalar_select 0, %s6, %s4
  $region1: #{tpu_custom_call.1} parent=0
    #allocation2 [shape = 'u8[16384]{0}', space=vmem, size = 0x4000, scoped, tag = 'input window, operand 0']
    #allocation3 [shape = 's32[2]{0}', space=sflag, size = 0x8, scoped, tag = 'scoped memory for tpu_custom_call.1']
    #allocation4 [shape = 's32[2]{0}', space=sflag, size = 0x8, scoped, tag = 'scoped memory for tpu_custom_call.1']
    #allocation5 [shape = 'u8[983040]{0}', space=vmem, size = 0xf0000, scoped, tag = 'input window, operand 1, single buffered']
    #allocation6 [shape = 's32[1]{0}', space=sflag, size = 0x4, scoped, tag = 'scoped memory for tpu_custom_call.1']
    #allocation7 [shape = 'u8[2560]{0}', space=vmem, size = 0xc00, scoped, tag = 'input window, operand 2, single buffered']
    #allocation8 [shape = 'u8[16384]{0}', space=vmem, size = 0x4000, scoped, tag = 'output window, operand 0']
    %8 = vsyncpa [#allocation3], 0
    %s9 = scalar_lea.sflag [#allocation3], 1
    %10 = vsyncpa %s9, 0
    %11 = vsyncpa [#allocation6], 0
    %12 = vsyncpa [#allocation4], 0
    %s13 = scalar_lea.sflag [#allocation4], 1
    %14 = vsyncpa %s13, 0
    loop: start=0, step=1, limit=4
    $region2: #{tpu_custom_call.1} parent=1 // loop_pre_header
      _
    $region3: #{tpu_custom_call.1} parent=1 // loop_header
      %s16 = sphi 0, %s20
      %p17 = scmp.ge.s32.totalorder %s16, 4
      %s26 = sphi 0, %s28
      %s29 = sphi 0, %s26
      %s30 = sphi 0, %s29
      %s46 = sphi 0, %s30
      %s50 = sphi 0, %s50
      %s52 = sphi 0, %s50
      %s53 = sphi 0, %s52
      %s67 = sphi 0, %s53
      %s71 = sphi 0, %s71
      %s73 = sphi 0, %s71
      %s74 = sphi 0, %s73
      %s88 = sphi 0, %s74
      %s94 = sphi 0, %s96
      %s97 = sphi 0, %s94
      %s98 = sphi 0, %s97
      %s114 = sphi 0, %s98
    $region4: #{tpu_custom_call.1} parent=1 // loop_header_branch
      %19 = sbr.rel (%p17) target = $region8
    $region5: #{tpu_custom_call.1} parent=1 // loop_body
      %s21 = ssub.s32 %s16, 1
      %s22 = ssub.s32 %s16, 2
      %s23 = sadd.s32 %s16, 1
      %s24 = ssub.s32 %s16, %s23
      %p25 = scmp.eq.s32.totalorder %s24, 0
      %s27 = sadd.s32 %s26, 1
      %s28 = scalar_select %p25, %s26, %s27
      %p31 = pneg %p25
      %p32 = scmp.eq.s32.totalorder %s16, 1
      %p33 = por %p31, %p32
      %p34 = scmp.ne.s32.totalorder %s26, %s29
      %p35 = scmp.eq.s32.totalorder %s16, 0
      %p36 = por %p34, %p35
      %p37 = scmp.ne.s32.totalorder %s26, %s29
      %p38 = scmp.eq.s32.totalorder %s21, 1
      %p39 = por %p37, %p38
      %p40 = scmp.ne.s32.totalorder %s29, %s30
      %p41 = scmp.eq.s32.totalorder %s21, 0
      %p42 = por %p40, %p41
      %p43 = scmp.ne.s32.totalorder %s29, %s30
      %p44 = scmp.eq.s32.totalorder %s22, 1
      %p45 = por %p43, %p44
      %p47 = scmp.ne.s32.totalorder %s30, %s46
      %p48 = scmp.eq.s32.totalorder %s22, 0
      %p49 = por %p47, %p48
      %s51 = sadd.s32 %s50, 1
      %p54 = scmp.eq.s32.totalorder %s16, 1
      %p55 = scmp.ne.s32.totalorder %s50, %s52
      %p56 = scmp.eq.s32.totalorder %s16, 0
      %p57 = por %p55, %p56
      %p58 = scmp.ne.s32.totalorder %s50, %s52
      %p59 = scmp.eq.s32.totalorder %s21, 1
      %p60 = por %p58, %p59
      %p61 = scmp.ne.s32.totalorder %s52, %s53
      %p62 = scmp.eq.s32.totalorder %s21, 0
      %p63 = por %p61, %p62
      %p64 = scmp.ne.s32.totalorder %s52, %s53
      %p65 = scmp.eq.s32.totalorder %s22, 1
      %p66 = por %p64, %p65
      %p68 = scmp.ne.s32.totalorder %s53, %s67
      %p69 = scmp.eq.s32.totalorder %s22, 0
      %p70 = por %p68, %p69
      %s72 = sadd.s32 %s71, 1
      %p75 = scmp.eq.s32.totalorder %s16, 1
      %p76 = scmp.ne.s32.totalorder %s71, %s73
      %p77 = scmp.eq.s32.totalorder %s16, 0
      %p78 = por %p76, %p77
      %p79 = scmp.ne.s32.totalorder %s71, %s73
      %p80 = scmp.eq.s32.totalorder %s21, 1
      %p81 = por %p79, %p80
      %p82 = scmp.ne.s32.totalorder %s73, %s74
      %p83 = scmp.eq.s32.totalorder %s21, 0
      %p84 = por %p82, %p83
      %p85 = scmp.ne.s32.totalorder %s73, %s74
      %p86 = scmp.eq.s32.totalorder %s22, 1
      %p87 = por %p85, %p86
      %p89 = scmp.ne.s32.totalorder %s74, %s88
      %p90 = scmp.eq.s32.totalorder %s22, 0
      %p91 = por %p89, %p90
      %s92 = ssub.s32 %s16, %s23
      %p93 = scmp.eq.s32.totalorder %s92, 0
      %s95 = sadd.s32 %s94, 1
      %s96 = scalar_select %p93, %s94, %s95
      %p99 = pneg %p93
      %p100 = scmp.eq.s32.totalorder %s16, 1
      %p101 = por %p99, %p100
      %p102 = scmp.ne.s32.totalorder %s94, %s97
      %p103 = scmp.eq.s32.totalorder %s16, 0
      %p104 = por %p102, %p103
      %p105 = scmp.ne.s32.totalorder %s94, %s97
      %p106 = scmp.eq.s32.totalorder %s21, 1
      %p107 = por %p105, %p106
      %p108 = scmp.ne.s32.totalorder %s97, %s98
      %p109 = scmp.eq.s32.totalorder %s21, 0
      %p110 = por %p108, %p109
      %p111 = scmp.ne.s32.totalorder %s97, %s98
      %p112 = scmp.eq.s32.totalorder %s22, 1
      %p113 = por %p111, %p112
      %p115 = scmp.ne.s32.totalorder %s98, %s114
      %p116 = scmp.eq.s32.totalorder %s22, 0
      %p117 = por %p115, %p116
      %p118 = scmp.le.s32.totalorder 1, %s16
      %p119 = scmp.lt.s32.totalorder %s16, 3
      %p120 = pnand %p118, %p119
      %p121 = pneg %p120
      // Predicated region
      $region9: #{tpu_custom_call.1} parent=5 // pred_check
        _
      $region10: #{tpu_custom_call.1} parent=5 // pred_check_branch
        %123 = sbr.rel (%p120) target = $region12
      $region11: #{tpu_custom_call.1} parent=5 // pred_region
        %s124 = ssub.s32 %s16, 1
        // Predicated region
        $region13: #{tpu_custom_call.1} parent=11 // pred_check
          %p125 = pneg %p63
        $region14: #{tpu_custom_call.1} parent=11 // pred_check_branch
          %127 = sbr.rel (%p125) target = $region16
        $region15: #{tpu_custom_call.1} parent=11 // pred_region
          %s129 = ssub.s32 30720, 30720
          %130 = vsyncadd [#allocation6], %s129
          %s131 = sshll.u32 [#allocation5], 4
          %s132 = int_to_ptr.vmem [resolvable:$true] %s131
          %137 = dma.hbm_to_vmem [thread:$0]  %s1, 30720, %s132, [#allocation6], 128, 128, 8
        $region16: #{tpu_custom_call.1} parent=11 // pred_fallthru
          _
        // Predicated region
        $region17: #{tpu_custom_call.1} parent=11 // pred_check
          %p138 = pneg %p84
        $region18: #{tpu_custom_call.1} parent=11 // pred_check_branch
          %140 = sbr.rel (%p138) target = $region20
        $region19: #{tpu_custom_call.1} parent=11 // pred_region
          %s142 = ssub.s32 80, 80
          %143 = vsyncadd [#allocation6], %s142
          %s144 = sshll.u32 [#allocation7], 4
          %s145 = int_to_ptr.vmem [resolvable:$true] %s144
          %150 = dma.hbm_to_vmem [thread:$0]  %s2, 80, %s145, [#allocation6], 16, 16, 1
        $region20: #{tpu_custom_call.1} parent=11 // pred_fallthru
          _
      $region12: #{tpu_custom_call.1} parent=5 // pred_fallthru
        _
      %p151 = scmp.lt.s32.totalorder %s16, 2
      // Predicated region
      $region21: #{tpu_custom_call.1} parent=5 // pred_check
        %p152 = pneg %p151
      $region22: #{tpu_custom_call.1} parent=5 // pred_check_branch
        %154 = sbr.rel (%p152) target = $region24
      $region23: #{tpu_custom_call.1} parent=5 // pred_region
        // Predicated region
        $region25: #{tpu_custom_call.1} parent=23 // pred_check
          %p155 = pneg %p36
        $region26: #{tpu_custom_call.1} parent=23 // pred_check_branch
          %157 = sbr.rel (%p155) target = $region28
        $region27: #{tpu_custom_call.1} parent=23 // pred_region
          %s158 = sand.u32 %s26, 1
          %s159 = scalar_lea.sflag [#allocation3], %s158
          %s160 = sand.u32 %s26, 1
          %s161 = smul.addr %s160, 16
          %s162 = scalar_lea.vmem [#allocation2], %s161
          %s164 = ssub.s32 256, 256
          %165 = vsyncadd %s159, %s164
          %s166 = smul.addr %s16, 2
          %s167 = smul.addr %s166, 128
          %s168 = scalar_lea.hbm %s0, %s167
          %s169 = sshll.u32 %s162, 4
          %s170 = int_to_ptr.vmem [resolvable:$true] %s169
          %175 = dma.hbm_to_vmem [thread:$0]  %s168, 256, %s170, %s159, 128, 128, 8
        $region28: #{tpu_custom_call.1} parent=23 // pred_fallthru
          _
      $region24: #{tpu_custom_call.1} parent=5 // pred_fallthru
        _
      %p176 = scmp.le.s32.totalorder 1, %s16
      %p177 = scmp.lt.s32.totalorder %s16, 3
      %p178 = pnand %p176, %p177
      %p179 = pneg %p178
      // Predicated region
      $region29: #{tpu_custom_call.1} parent=5 // pred_check
        _
      $region30: #{tpu_custom_call.1} parent=5 // pred_check_branch
        %181 = sbr.rel (%p178) target = $region32
      $region31: #{tpu_custom_call.1} parent=5 // pred_region
        %s182 = ssub.s32 %s16, 1
        %s183 = sand.u32 %s29, 1
        %s184 = scalar_lea.sflag [#allocation3], %s183
        %s185 = sand.u32 %s29, 1
        %s186 = smul.addr %s185, 16
        %s187 = scalar_lea.vmem [#allocation2], %s186
        // Predicated region
        $region33: #{tpu_custom_call.1} parent=31 // pred_check
          %p188 = pneg %p42
        $region34: #{tpu_custom_call.1} parent=31 // pred_check_branch
          %190 = sbr.rel (%p188) target = $region36
        $region35: #{tpu_custom_call.1} parent=31 // pred_region
          %191 = dma.done %s184, 256
        $region36: #{tpu_custom_call.1} parent=31 // pred_fallthru
          _
        // Predicated region
        $region37: #{tpu_custom_call.1} parent=31 // pred_check
          %p192 = pneg %p63
        $region38: #{tpu_custom_call.1} parent=31 // pred_check_branch
          %194 = sbr.rel (%p192) target = $region40
        $region39: #{tpu_custom_call.1} parent=31 // pred_region
          %195 = dma.done [#allocation6], 30720
        $region40: #{tpu_custom_call.1} parent=31 // pred_fallthru
          _
        // Predicated region
        $region41: #{tpu_custom_call.1} parent=31 // pred_check
          %p196 = pneg %p84
        $region42: #{tpu_custom_call.1} parent=31 // pred_check_branch
          %198 = sbr.rel (%p196) target = $region44
        $region43: #{tpu_custom_call.1} parent=31 // pred_region
          %199 = dma.done [#allocation6], 80
        $region44: #{tpu_custom_call.1} parent=31 // pred_fallthru
          _
        %s200 = sand.u32 %s29, 1
        %s201 = scalar_lea.sflag [#allocation3], %s200
        %s202 = sand.u32 %s29, 1
        %s203 = smul.addr %s202, 16
        %s204 = scalar_lea.vmem [#allocation2], %s203
        %p205 = pneg %p42
        %p206 = pneg %p39
        %p207 = pneg %p63
        %p208 = pneg %p60
        %p209 = pneg %p84
        %p210 = pneg %p81
        %p211 = pneg %p110
        %p212 = pneg %p107
        %s213 = sand.u32 %s97, 1
        %s214 = scalar_lea.sflag [#allocation4], %s213
        %s215 = sand.u32 %s97, 1
        %s216 = smul.addr %s215, 16
        %s217 = scalar_lea.vmem [#allocation8], %s216
        %v218 = vld [vmem:[%s187] sm:$0xff]
        %v219 = vld [vmem:[%s187 + $0x8] sm:$0xff]
        %v220 = vld [vmem:[#allocation5] sm:$0xff]
        %v221 = vld [vmem:[#allocation5 + $0x8] sm:$0xff]
        %v222 = vld [vmem:[#allocation5 + $0x10] sm:$0xff]
        %v223 = vld [vmem:[#allocation5 + $0x18] sm:$0xff]
        %v224 = vld [vmem:[#allocation5 + $0x20] sm:$0xff]
        %v225 = vld [vmem:[#allocation5 + $0x28] sm:$0xff]
        %v226 = vld [vmem:[#allocation5 + $0x30] sm:$0xff]
        %v227 = vld [vmem:[#allocation5 + $0x38] sm:$0xff]
        %v228 = vld [vmem:[#allocation5 + $0x40] sm:$0xff]
        %v229 = vld [vmem:[#allocation5 + $0x48] sm:$0xff]
        %v230 = vld [vmem:[#allocation5 + $0x50] sm:$0xff]
        %v231 = vld [vmem:[#allocation5 + $0x58] sm:$0xff]
        %v232 = vld [vmem:[#allocation5 + $0x60] sm:$0xff]
        %v233 = vld [vmem:[#allocation5 + $0x68] sm:$0xff]
        %v234 = vld [vmem:[#allocation5 + $0x70] sm:$0xff]
        %v235 = vld [vmem:[#allocation5 + $0x78] sm:$0xff]
        %v236 = vld [vmem:[#allocation5 + $0x80] sm:$0xff]
        %v237 = vld [vmem:[#allocation5 + $0x88] sm:$0xff]
        %v238 = vld [vmem:[#allocation5 + $0x90] sm:$0xff]
        %v239 = vld [vmem:[#allocation5 + $0x98] sm:$0xff]
        %v240 = vld [vmem:[#allocation5 + $0xa0] sm:$0xff]
        %v241 = vld [vmem:[#allocation5 + $0xa8] sm:$0xff]
        %v242 = vld [vmem:[#allocation5 + $0xb0] sm:$0xff]
        %v243 = vld [vmem:[#allocation5 + $0xb8] sm:$0xff]
        %v244 = vld [vmem:[#allocation5 + $0xc0] sm:$0xff]
        %v245 = vld [vmem:[#allocation5 + $0xc8] sm:$0xff]
        %v246 = vld [vmem:[#allocation5 + $0xd0] sm:$0xff]
        %v247 = vld [vmem:[#allocation5 + $0xd8] sm:$0xff]
        %v248 = vld [vmem:[#allocation5 + $0xe0] sm:$0xff]
        %v249 = vld [vmem:[#allocation5 + $0xe8] sm:$0xff]
        %v250 = vld [vmem:[#allocation5 + $0xf0] sm:$0xff]
        %v251 = vld [vmem:[#allocation5 + $0xf8] sm:$0xff]
        %v252 = vld [vmem:[#allocation5 + $0x100] sm:$0xff]
        %v253 = vld [vmem:[#allocation5 + $0x108] sm:$0xff]
        %v254 = vld [vmem:[#allocation5 + $0x110] sm:$0xff]
        %v255 = vld [vmem:[#allocation5 + $0x118] sm:$0xff]
        %v256 = vld [vmem:[#allocation5 + $0x120] sm:$0xff]
        %v257 = vld [vmem:[#allocation5 + $0x128] sm:$0xff]
        %v258 = vld [vmem:[#allocation5 + $0x130] sm:$0xff]
        %v259 = vld [vmem:[#allocation5 + $0x138] sm:$0xff]
        %v260 = vld [vmem:[#allocation5 + $0x140] sm:$0xff]
        %v261 = vld [vmem:[#allocation5 + $0x148] sm:$0xff]
        %v262 = vld [vmem:[#allocation5 + $0x150] sm:$0xff]
        %v263 = vld [vmem:[#allocation5 + $0x158] sm:$0xff]
        %v264 = vld [vmem:[#allocation5 + $0x160] sm:$0xff]
        %v265 = vld [vmem:[#allocation5 + $0x168] sm:$0xff]
        %v266 = vld [vmem:[#allocation5 + $0x170] sm:$0xff]
        %v267 = vld [vmem:[#allocation5 + $0x178] sm:$0xff]
        %v268 = vld [vmem:[#allocation7] sm:$0x1]
        %vm271 = vcmask 1040384
        %v272 = vrot.slane %v218, 7
        %v273 = vrot.slane %v219, 7
        %v274 = vsel %vm271, %v272, %v273
        %v277 = vsel %vm271, 0.0, %v272
        %vm278 = vcmask 1046528
        %v279 = vrot.slane %v218, 1
        %v280 = vrot.slane %v219, 1
        %v281 = vsel %vm278, %v279, %v280
        %v284 = vsel %vm278, %v280, 0.0
        %285 = vmatprep.subr.mxu0 0.0
        %286 = vmatpush1.msra.mxu0 %v251
        %287 = vmatprep.subr.mxu0 0.0
        %288 = vmatpush1.msra.mxu0 %v250
        %289 = vmatprep.subr.mxu0 0.0
        %290 = vmatpush1.msra.mxu0 %v249
        %291 = vmatprep.subr.mxu0 0.0
        %292 = vmatpush1.msra.mxu0 %v248
        %293 = vmatprep.subr.mxu0 0.0
        %294 = vmatpush1.msra.mxu0 %v247
        %295 = vmatprep.subr.mxu0 0.0
        %296 = vmatpush1.msra.mxu0 %v246
        %297 = vmatprep.subr.mxu0 0.0
        %298 = vmatpush1.msra.mxu0 %v245
        %299 = vmatprep.subr.mxu0 0.0
        %300 = vmatpush1.msra.mxu0 %v244
        %301 = vmatprep.subr.mxu0 0.0
        %302 = vmatpush1.msra.mxu0 %v243
        %303 = vmatprep.subr.mxu0 0.0
        %304 = vmatpush1.msra.mxu0 %v242
        %305 = vmatprep.subr.mxu0 0.0
        %306 = vmatpush1.msra.mxu0 %v241
        %307 = vmatprep.subr.mxu0 0.0
        %308 = vmatpush1.msra.mxu0 %v240
        %309 = vmatprep.subr.mxu0 0.0
        %310 = vmatpush1.msra.mxu0 %v239
        %311 = vmatprep.subr.mxu0 0.0
        %312 = vmatpush1.msra.mxu0 %v238
        %313 = vmatprep.subr.mxu0 0.0
        %314 = vmatpush1.msra.mxu0 %v237
        %315 = vmatprep.subr.mxu0 0.0
        %316 = vmatpush1.msra.mxu0 %v236
        %317 = vmatprep.subr.mxu0 0.0
        %318 = vmatpush2.msra.mxu0 0.0
        %319 = vmatprep.subr.mxu0 0.0
        %320 = vmatpush2.msra.mxu0 0.0
        %321 = vmatprep.subr.mxu0 0.0
        %322 = vmatpush2.msra.mxu0 0.0
        %323 = vmatprep.subr.mxu0 0.0
        %324 = vmatpush2.msra.mxu0 0.0
        %325 = vmatprep.subr.mxu0 0.0
        %326 = vmatpush2.msra.mxu0 0.0
        %327 = vmatprep.subr.mxu0 0.0
        %328 = vmatpush2.msra.mxu0 0.0
        %329 = vmatprep.subr.mxu0 0.0
        %330 = vmatpush2.msra.mxu0 0.0
        %331 = vmatprep.subr.mxu0 0.0
        %332 = vmatpush2.msra.mxu0 0.0
        %333 = vmatprep.subr.mxu0 0.0
        %334 = vmatpush2.msra.mxu0 0.0
        %335 = vmatprep.subr.mxu0 0.0
        %336 = vmatpush2.msra.mxu0 0.0
        %337 = vmatprep.subr.mxu0 0.0
        %338 = vmatpush2.msra.mxu0 0.0
        %339 = vmatprep.subr.mxu0 0.0
        %340 = vmatpush2.msra.mxu0 0.0
        %341 = vmatprep.subr.mxu0 0.0
        %342 = vmatpush2.msra.mxu0 0.0
        %343 = vmatprep.subr.mxu0 0.0
        %344 = vmatpush2.msra.mxu0 0.0
        %345 = vmatprep.subr.mxu0 0.0
        %346 = vmatpush2.msra.mxu0 0.0
        %347 = vmatprep.subr.mxu0 0.0
        %348 = vmatpush2.msra.mxu0 0.0
        %349 = vmatprep.mubr.f32.mxu0 0.0
        %350 = vmatmul.mubr.f32.gmra.mxu0 %v218
        %v351 = vpop.f32.mrf.mxu0
        %v352 = vadd.f32 0.0, %v351
        %v353 = vpop.f32.mrf.mxu0
        %354 = vmatprep.mubr.f32.mxu0 0.0
        %355 = vmatmul.mubr.f32.gmra.mxu0 %v219
        %v356 = vpop.f32.mrf.mxu0
        %v357 = vadd.f32 0.0, %v356
        %v358 = vpop.f32.mrf.mxu0
        %359 = vdwg.mxu0
        %360 = vmatprep.subr.mxu0 0.0
        %361 = vmatpush1.msra.mxu0 %v235
        %362 = vmatprep.subr.mxu0 0.0
        %363 = vmatpush1.msra.mxu0 %v234
        %364 = vmatprep.subr.mxu0 0.0
        %365 = vmatpush1.msra.mxu0 %v233
        %366 = vmatprep.subr.mxu0 0.0
        %367 = vmatpush1.msra.mxu0 %v232
        %368 = vmatprep.subr.mxu0 0.0
        %369 = vmatpush1.msra.mxu0 %v231
        %370 = vmatprep.subr.mxu0 0.0
        %371 = vmatpush1.msra.mxu0 %v230
        %372 = vmatprep.subr.mxu0 0.0
        %373 = vmatpush1.msra.mxu0 %v229
        %374 = vmatprep.subr.mxu0 0.0
        %375 = vmatpush1.msra.mxu0 %v228
        %376 = vmatprep.subr.mxu0 0.0
        %377 = vmatpush1.msra.mxu0 %v227
        %378 = vmatprep.subr.mxu0 0.0
        %379 = vmatpush1.msra.mxu0 %v226
        %380 = vmatprep.subr.mxu0 0.0
        %381 = vmatpush1.msra.mxu0 %v225
        %382 = vmatprep.subr.mxu0 0.0
        %383 = vmatpush1.msra.mxu0 %v224
        %384 = vmatprep.subr.mxu0 0.0
        %385 = vmatpush1.msra.mxu0 %v223
        %386 = vmatprep.subr.mxu0 0.0
        %387 = vmatpush1.msra.mxu0 %v222
        %388 = vmatprep.subr.mxu0 0.0
        %389 = vmatpush1.msra.mxu0 %v221
        %390 = vmatprep.subr.mxu0 0.0
        %391 = vmatpush1.msra.mxu0 %v220
        %392 = vmatprep.subr.mxu0 0.0
        %393 = vmatpush2.msra.mxu0 0.0
        %394 = vmatprep.subr.mxu0 0.0
        %395 = vmatpush2.msra.mxu0 0.0
        %396 = vmatprep.subr.mxu0 0.0
        %397 = vmatpush2.msra.mxu0 0.0
        %398 = vmatprep.subr.mxu0 0.0
        %399 = vmatpush2.msra.mxu0 0.0
        %400 = vmatprep.subr.mxu0 0.0
        %401 = vmatpush2.msra.mxu0 0.0
        %402 = vmatprep.subr.mxu0 0.0
        %403 = vmatpush2.msra.mxu0 0.0
        %404 = vmatprep.subr.mxu0 0.0
        %405 = vmatpush2.msra.mxu0 0.0
        %406 = vmatprep.subr.mxu0 0.0
        %407 = vmatpush2.msra.mxu0 0.0
        %408 = vmatprep.subr.mxu0 0.0
        %409 = vmatpush2.msra.mxu0 0.0
        %410 = vmatprep.subr.mxu0 0.0
        %411 = vmatpush2.msra.mxu0 0.0
        %412 = vmatprep.subr.mxu0 0.0
        %413 = vmatpush2.msra.mxu0 0.0
        %414 = vmatprep.subr.mxu0 0.0
        %415 = vmatpush2.msra.mxu0 0.0
        %416 = vmatprep.subr.mxu0 0.0
        %417 = vmatpush2.msra.mxu0 0.0
        %418 = vmatprep.subr.mxu0 0.0
        %419 = vmatpush2.msra.mxu0 0.0
        %420 = vmatprep.subr.mxu0 0.0
        %421 = vmatpush2.msra.mxu0 0.0
        %422 = vmatprep.subr.mxu0 0.0
        %423 = vmatpush2.msra.mxu0 0.0
        %424 = vmatprep.mubr.f32.mxu0 0.0
        %425 = vmatmul.mubr.f32.gmra.mxu0 %v277
        %v426 = vpop.f32.mrf.mxu0
        %v427 = vadd.f32 %v352, %v426
        %v428 = vpop.f32.mrf.mxu0
        %429 = vmatprep.mubr.f32.mxu0 0.0
        %430 = vmatmul.mubr.f32.gmra.mxu0 %v274
        %v431 = vpop.f32.mrf.mxu0
        %v432 = vadd.f32 %v357, %v431
        %v433 = vpop.f32.mrf.mxu0
        %434 = vdwg.mxu0
        %435 = vmatprep.subr.mxu0 0.0
        %436 = vmatpush1.msra.mxu0 %v267
        %437 = vmatprep.subr.mxu0 0.0
        %438 = vmatpush1.msra.mxu0 %v266
        %439 = vmatprep.subr.mxu0 0.0
        %440 = vmatpush1.msra.mxu0 %v265
        %441 = vmatprep.subr.mxu0 0.0
        %442 = vmatpush1.msra.mxu0 %v264
        %443 = vmatprep.subr.mxu0 0.0
        %444 = vmatpush1.msra.mxu0 %v263
        %445 = vmatprep.subr.mxu0 0.0
        %446 = vmatpush1.msra.mxu0 %v262
        %447 = vmatprep.subr.mxu0 0.0
        %448 = vmatpush1.msra.mxu0 %v261
        %449 = vmatprep.subr.mxu0 0.0
        %450 = vmatpush1.msra.mxu0 %v260
        %451 = vmatprep.subr.mxu0 0.0
        %452 = vmatpush1.msra.mxu0 %v259
        %453 = vmatprep.subr.mxu0 0.0
        %454 = vmatpush1.msra.mxu0 %v258
        %455 = vmatprep.subr.mxu0 0.0
        %456 = vmatpush1.msra.mxu0 %v257
        %457 = vmatprep.subr.mxu0 0.0
        %458 = vmatpush1.msra.mxu0 %v256
        %459 = vmatprep.subr.mxu0 0.0
        %460 = vmatpush1.msra.mxu0 %v255
        %461 = vmatprep.subr.mxu0 0.0
        %462 = vmatpush1.msra.mxu0 %v254
        %463 = vmatprep.subr.mxu0 0.0
        %464 = vmatpush1.msra.mxu0 %v253
        %465 = vmatprep.subr.mxu0 0.0
        %466 = vmatpush1.msra.mxu0 %v252
        %467 = vmatprep.subr.mxu0 0.0
        %468 = vmatpush2.msra.mxu0 0.0
        %469 = vmatprep.subr.mxu0 0.0
        %470 = vmatpush2.msra.mxu0 0.0
        %471 = vmatprep.subr.mxu0 0.0
        %472 = vmatpush2.msra.mxu0 0.0
        %473 = vmatprep.subr.mxu0 0.0
        %474 = vmatpush2.msra.mxu0 0.0
        %475 = vmatprep.subr.mxu0 0.0
        %476 = vmatpush2.msra.mxu0 0.0
        %477 = vmatprep.subr.mxu0 0.0
        %478 = vmatpush2.msra.mxu0 0.0
        %479 = vmatprep.subr.mxu0 0.0
        %480 = vmatpush2.msra.mxu0 0.0
        %481 = vmatprep.subr.mxu0 0.0
        %482 = vmatpush2.msra.mxu0 0.0
        %483 = vmatprep.subr.mxu0 0.0
        %484 = vmatpush2.msra.mxu0 0.0
        %485 = vmatprep.subr.mxu0 0.0
        %486 = vmatpush2.msra.mxu0 0.0
        %487 = vmatprep.subr.mxu0 0.0
        %488 = vmatpush2.msra.mxu0 0.0
        %489 = vmatprep.subr.mxu0 0.0
        %490 = vmatpush2.msra.mxu0 0.0
        %491 = vmatprep.subr.mxu0 0.0
        %492 = vmatpush2.msra.mxu0 0.0
        %493 = vmatprep.subr.mxu0 0.0
        %494 = vmatpush2.msra.mxu0 0.0
        %495 = vmatprep.subr.mxu0 0.0
        %496 = vmatpush2.msra.mxu0 0.0
        %497 = vmatprep.subr.mxu0 0.0
        %498 = vmatpush2.msra.mxu0 0.0
        %499 = vmatprep.mubr.f32.mxu0 0.0
        %500 = vmatmul.mubr.f32.gmra.mxu0 %v281
        %v501 = vpop.f32.mrf.mxu0
        %v502 = vadd.f32 0.0, %v501
        %v503 = vpop.f32.mrf.mxu0
        %504 = vmatprep.mubr.f32.mxu0 0.0
        %505 = vmatmul.mubr.f32.gmra.mxu0 %v284
        %v506 = vpop.f32.mrf.mxu0
        %v507 = vadd.f32 0.0, %v506
        %v508 = vpop.f32.mrf.mxu0
        %509 = vdwg.mxu0
        %v510 = vadd.f32 %v427, %v502
        %v511 = vadd.f32 %v432, %v507
        %v513 = vlaneseq
        %v514 = vshrl.u32 %v513, 7
        %v515 = vsub.s32 0, %v514
        %v516 = vrot.slane %v268, %v515
        %v518 = vadd.f32 %v510, %v516
        %v519 = vadd.f32 %v511, %v516
        %v520 = vadd.f32 %v518, %v218
        %v521 = vadd.f32 %v519, %v219
        %v522 = vtanh.pop %v520
        %v523 = vtanh.pop %v521
        %s524 = scalar_lea.vmem [#allocation5], 384
        %v525 = vld [vmem:[%s524] sm:$0xff]
        %v526 = vld [vmem:[%s524 + $0x8] sm:$0xff]
        %v527 = vld [vmem:[%s524 + $0x10] sm:$0xff]
        %v528 = vld [vmem:[%s524 + $0x18] sm:$0xff]
        %v529 = vld [vmem:[%s524 + $0x20] sm:$0xff]
        %v530 = vld [vmem:[%s524 + $0x28] sm:$0xff]
        %v531 = vld [vmem:[%s524 + $0x30] sm:$0xff]
        %v532 = vld [vmem:[%s524 + $0x38] sm:$0xff]
        %v533 = vld [vmem:[%s524 + $0x40] sm:$0xff]
        %v534 = vld [vmem:[%s524 + $0x48] sm:$0xff]
        %v535 = vld [vmem:[%s524 + $0x50] sm:$0xff]
        %v536 = vld [vmem:[%s524 + $0x58] sm:$0xff]
        %v537 = vld [vmem:[%s524 + $0x60] sm:$0xff]
        %v538 = vld [vmem:[%s524 + $0x68] sm:$0xff]
        %v539 = vld [vmem:[%s524 + $0x70] sm:$0xff]
        %v540 = vld [vmem:[%s524 + $0x78] sm:$0xff]
        %v541 = vld [vmem:[%s524 + $0x80] sm:$0xff]
        %v542 = vld [vmem:[%s524 + $0x88] sm:$0xff]
        %v543 = vld [vmem:[%s524 + $0x90] sm:$0xff]
        %v544 = vld [vmem:[%s524 + $0x98] sm:$0xff]
        %v545 = vld [vmem:[%s524 + $0xa0] sm:$0xff]
        %v546 = vld [vmem:[%s524 + $0xa8] sm:$0xff]
        %v547 = vld [vmem:[%s524 + $0xb0] sm:$0xff]
        %v548 = vld [vmem:[%s524 + $0xb8] sm:$0xff]
        %v549 = vld [vmem:[%s524 + $0xc0] sm:$0xff]
        %v550 = vld [vmem:[%s524 + $0xc8] sm:$0xff]
        %v551 = vld [vmem:[%s524 + $0xd0] sm:$0xff]
        %v552 = vld [vmem:[%s524 + $0xd8] sm:$0xff]
        %v553 = vld [vmem:[%s524 + $0xe0] sm:$0xff]
        %v554 = vld [vmem:[%s524 + $0xe8] sm:$0xff]
        %v555 = vld [vmem:[%s524 + $0xf0] sm:$0xff]
        %v556 = vld [vmem:[%s524 + $0xf8] sm:$0xff]
        %v557 = vld [vmem:[%s524 + $0x100] sm:$0xff]
        %v558 = vld [vmem:[%s524 + $0x108] sm:$0xff]
        %v559 = vld [vmem:[%s524 + $0x110] sm:$0xff]
        %v560 = vld [vmem:[%s524 + $0x118] sm:$0xff]
        %v561 = vld [vmem:[%s524 + $0x120] sm:$0xff]
        %v562 = vld [vmem:[%s524 + $0x128] sm:$0xff]
        %v563 = vld [vmem:[%s524 + $0x130] sm:$0xff]
        %v564 = vld [vmem:[%s524 + $0x138] sm:$0xff]
        %v565 = vld [vmem:[%s524 + $0x140] sm:$0xff]
        %v566 = vld [vmem:[%s524 + $0x148] sm:$0xff]
        %v567 = vld [vmem:[%s524 + $0x150] sm:$0xff]
        %v568 = vld [vmem:[%s524 + $0x158] sm:$0xff]
        %v569 = vld [vmem:[%s524 + $0x160] sm:$0xff]
        %v570 = vld [vmem:[%s524 + $0x168] sm:$0xff]
        %v571 = vld [vmem:[%s524 + $0x170] sm:$0xff]
        %v572 = vld [vmem:[%s524 + $0x178] sm:$0xff]
        %s573 = scalar_lea.vmem [#allocation7], 1
        %v574 = vld [vmem:[%s573] sm:$0x1]
        %v577 = vrot.slane %v522, 7
        %v578 = vrot.slane %v523, 7
        %v579 = vsel %vm271, %v577, %v578
        %v582 = vsel %vm271, 0.0, %v577
        %v583 = vrot.slane %v522, 1
        %v584 = vrot.slane %v523, 1
        %v585 = vsel %vm278, %v583, %v584
        %v588 = vsel %vm278, %v584, 0.0
        %589 = vmatprep.subr.mxu0 0.0
        %590 = vmatpush1.msra.mxu0 %v556
        %591 = vmatprep.subr.mxu0 0.0
        %592 = vmatpush1.msra.mxu0 %v555
        %593 = vmatprep.subr.mxu0 0.0
        %594 = vmatpush1.msra.mxu0 %v554
        %595 = vmatprep.subr.mxu0 0.0
        %596 = vmatpush1.msra.mxu0 %v553
        %597 = vmatprep.subr.mxu0 0.0
        %598 = vmatpush1.msra.mxu0 %v552
        %599 = vmatprep.subr.mxu0 0.0
        %600 = vmatpush1.msra.mxu0 %v551
        %601 = vmatprep.subr.mxu0 0.0
        %602 = vmatpush1.msra.mxu0 %v550
        %603 = vmatprep.subr.mxu0 0.0
        %604 = vmatpush1.msra.mxu0 %v549
        %605 = vmatprep.subr.mxu0 0.0
        %606 = vmatpush1.msra.mxu0 %v548
        %607 = vmatprep.subr.mxu0 0.0
        %608 = vmatpush1.msra.mxu0 %v547
        %609 = vmatprep.subr.mxu0 0.0
        %610 = vmatpush1.msra.mxu0 %v546
        %611 = vmatprep.subr.mxu0 0.0
        %612 = vmatpush1.msra.mxu0 %v545
        %613 = vmatprep.subr.mxu0 0.0
        %614 = vmatpush1.msra.mxu0 %v544
        %615 = vmatprep.subr.mxu0 0.0
        %616 = vmatpush1.msra.mxu0 %v543
        %617 = vmatprep.subr.mxu0 0.0
        %618 = vmatpush1.msra.mxu0 %v542
        %619 = vmatprep.subr.mxu0 0.0
        %620 = vmatpush1.msra.mxu0 %v541
        %621 = vmatprep.subr.mxu0 0.0
        %622 = vmatpush2.msra.mxu0 0.0
        %623 = vmatprep.subr.mxu0 0.0
        %624 = vmatpush2.msra.mxu0 0.0
        %625 = vmatprep.subr.mxu0 0.0
        %626 = vmatpush2.msra.mxu0 0.0
        %627 = vmatprep.subr.mxu0 0.0
        %628 = vmatpush2.msra.mxu0 0.0
        %629 = vmatprep.subr.mxu0 0.0
        %630 = vmatpush2.msra.mxu0 0.0
        %631 = vmatprep.subr.mxu0 0.0
        %632 = vmatpush2.msra.mxu0 0.0
        %633 = vmatprep.subr.mxu0 0.0
        %634 = vmatpush2.msra.mxu0 0.0
        %635 = vmatprep.subr.mxu0 0.0
        %636 = vmatpush2.msra.mxu0 0.0
        %637 = vmatprep.subr.mxu0 0.0
        %638 = vmatpush2.msra.mxu0 0.0
        %639 = vmatprep.subr.mxu0 0.0
        %640 = vmatpush2.msra.mxu0 0.0
        %641 = vmatprep.subr.mxu0 0.0
        %642 = vmatpush2.msra.mxu0 0.0
        %643 = vmatprep.subr.mxu0 0.0
        %644 = vmatpush2.msra.mxu0 0.0
        %645 = vmatprep.subr.mxu0 0.0
        %646 = vmatpush2.msra.mxu0 0.0
        %647 = vmatprep.subr.mxu0 0.0
        %648 = vmatpush2.msra.mxu0 0.0
        %649 = vmatprep.subr.mxu0 0.0
        %650 = vmatpush2.msra.mxu0 0.0
        %651 = vmatprep.subr.mxu0 0.0
        %652 = vmatpush2.msra.mxu0 0.0
        %653 = vmatprep.mubr.f32.mxu0 0.0
        %654 = vmatmul.mubr.f32.gmra.mxu0 %v522
        %v655 = vpop.f32.mrf.mxu0
        %v656 = vadd.f32 0.0, %v655
        %v657 = vpop.f32.mrf.mxu0
        %658 = vmatprep.mubr.f32.mxu0 0.0
        %659 = vmatmul.mubr.f32.gmra.mxu0 %v523
        %v660 = vpop.f32.mrf.mxu0
        %v661 = vadd.f32 0.0, %v660
        %v662 = vpop.f32.mrf.mxu0
        %663 = vdwg.mxu0
        %664 = vmatprep.subr.mxu0 0.0
        %665 = vmatpush1.msra.mxu0 %v540
        %666 = vmatprep.subr.mxu0 0.0
        %667 = vmatpush1.msra.mxu0 %v539
        %668 = vmatprep.subr.mxu0 0.0
        %669 = vmatpush1.msra.mxu0 %v538
        %670 = vmatprep.subr.mxu0 0.0
        %671 = vmatpush1.msra.mxu0 %v537
        %672 = vmatprep.subr.mxu0 0.0
        %673 = vmatpush1.msra.mxu0 %v536
        %674 = vmatprep.subr.mxu0 0.0
        %675 = vmatpush1.msra.mxu0 %v535
        %676 = vmatprep.subr.mxu0 0.0
        %677 = vmatpush1.msra.mxu0 %v534
        %678 = vmatprep.subr.mxu0 0.0
        %679 = vmatpush1.msra.mxu0 %v533
        %680 = vmatprep.subr.mxu0 0.0
        %681 = vmatpush1.msra.mxu0 %v532
        %682 = vmatprep.subr.mxu0 0.0
        %683 = vmatpush1.msra.mxu0 %v531
        %684 = vmatprep.subr.mxu0 0.0
        %685 = vmatpush1.msra.mxu0 %v530
        %686 = vmatprep.subr.mxu0 0.0
        %687 = vmatpush1.msra.mxu0 %v529
        %688 = vmatprep.subr.mxu0 0.0
        %689 = vmatpush1.msra.mxu0 %v528
        %690 = vmatprep.subr.mxu0 0.0
        %691 = vmatpush1.msra.mxu0 %v527
        %692 = vmatprep.subr.mxu0 0.0
        %693 = vmatpush1.msra.mxu0 %v526
        %694 = vmatprep.subr.mxu0 0.0
        %695 = vmatpush1.msra.mxu0 %v525
        %696 = vmatprep.subr.mxu0 0.0
        %697 = vmatpush2.msra.mxu0 0.0
        %698 = vmatprep.subr.mxu0 0.0
        %699 = vmatpush2.msra.mxu0 0.0
        %700 = vmatprep.subr.mxu0 0.0
        %701 = vmatpush2.msra.mxu0 0.0
        %702 = vmatprep.subr.mxu0 0.0
        %703 = vmatpush2.msra.mxu0 0.0
        %704 = vmatprep.subr.mxu0 0.0
        %705 = vmatpush2.msra.mxu0 0.0
        %706 = vmatprep.subr.mxu0 0.0
        %707 = vmatpush2.msra.mxu0 0.0
        %708 = vmatprep.subr.mxu0 0.0
        %709 = vmatpush2.msra.mxu0 0.0
        %710 = vmatprep.subr.mxu0 0.0
        %711 = vmatpush2.msra.mxu0 0.0
        %712 = vmatprep.subr.mxu0 0.0
        %713 = vmatpush2.msra.mxu0 0.0
        %714 = vmatprep.subr.mxu0 0.0
        %715 = vmatpush2.msra.mxu0 0.0
        %716 = vmatprep.subr.mxu0 0.0
        %717 = vmatpush2.msra.mxu0 0.0
        %718 = vmatprep.subr.mxu0 0.0
        %719 = vmatpush2.msra.mxu0 0.0
        %720 = vmatprep.subr.mxu0 0.0
        %721 = vmatpush2.msra.mxu0 0.0
        %722 = vmatprep.subr.mxu0 0.0
        %723 = vmatpush2.msra.mxu0 0.0
        %724 = vmatprep.subr.mxu0 0.0
        %725 = vmatpush2.msra.mxu0 0.0
        %726 = vmatprep.subr.mxu0 0.0
        %727 = vmatpush2.msra.mxu0 0.0
        %728 = vmatprep.mubr.f32.mxu0 0.0
        %729 = vmatmul.mubr.f32.gmra.mxu0 %v582
        %v730 = vpop.f32.mrf.mxu0
        %v731 = vadd.f32 %v656, %v730
        %v732 = vpop.f32.mrf.mxu0
        %733 = vmatprep.mubr.f32.mxu0 0.0
        %734 = vmatmul.mubr.f32.gmra.mxu0 %v579
        %v735 = vpop.f32.mrf.mxu0
        %v736 = vadd.f32 %v661, %v735
        %v737 = vpop.f32.mrf.mxu0
        %738 = vdwg.mxu0
        %739 = vmatprep.subr.mxu0 0.0
        %740 = vmatpush1.msra.mxu0 %v572
        %741 = vmatprep.subr.mxu0 0.0
        %742 = vmatpush1.msra.mxu0 %v571
        %743 = vmatprep.subr.mxu0 0.0
        %744 = vmatpush1.msra.mxu0 %v570
        %745 = vmatprep.subr.mxu0 0.0
        %746 = vmatpush1.msra.mxu0 %v569
        %747 = vmatprep.subr.mxu0 0.0
        %748 = vmatpush1.msra.mxu0 %v568
        %749 = vmatprep.subr.mxu0 0.0
        %750 = vmatpush1.msra.mxu0 %v567
        %751 = vmatprep.subr.mxu0 0.0
        %752 = vmatpush1.msra.mxu0 %v566
        %753 = vmatprep.subr.mxu0 0.0
        %754 = vmatpush1.msra.mxu0 %v565
        %755 = vmatprep.subr.mxu0 0.0
        %756 = vmatpush1.msra.mxu0 %v564
        %757 = vmatprep.subr.mxu0 0.0
        %758 = vmatpush1.msra.mxu0 %v563
        %759 = vmatprep.subr.mxu0 0.0
        %760 = vmatpush1.msra.mxu0 %v562
        %761 = vmatprep.subr.mxu0 0.0
        %762 = vmatpush1.msra.mxu0 %v561
        %763 = vmatprep.subr.mxu0 0.0
        %764 = vmatpush1.msra.mxu0 %v560
        %765 = vmatprep.subr.mxu0 0.0
        %766 = vmatpush1.msra.mxu0 %v559
        %767 = vmatprep.subr.mxu0 0.0
        %768 = vmatpush1.msra.mxu0 %v558
        %769 = vmatprep.subr.mxu0 0.0
        %770 = vmatpush1.msra.mxu0 %v557
        %771 = vmatprep.subr.mxu0 0.0
        %772 = vmatpush2.msra.mxu0 0.0
        %773 = vmatprep.subr.mxu0 0.0
        %774 = vmatpush2.msra.mxu0 0.0
        %775 = vmatprep.subr.mxu0 0.0
        %776 = vmatpush2.msra.mxu0 0.0
        %777 = vmatprep.subr.mxu0 0.0
        %778 = vmatpush2.msra.mxu0 0.0
        %779 = vmatprep.subr.mxu0 0.0
        %780 = vmatpush2.msra.mxu0 0.0
        %781 = vmatprep.subr.mxu0 0.0
        %782 = vmatpush2.msra.mxu0 0.0
        %783 = vmatprep.subr.mxu0 0.0
        %784 = vmatpush2.msra.mxu0 0.0
        %785 = vmatprep.subr.mxu0 0.0
        %786 = vmatpush2.msra.mxu0 0.0
        %787 = vmatprep.subr.mxu0 0.0
        %788 = vmatpush2.msra.mxu0 0.0
        %789 = vmatprep.subr.mxu0 0.0
        %790 = vmatpush2.msra.mxu0 0.0
        %791 = vmatprep.subr.mxu0 0.0
        %792 = vmatpush2.msra.mxu0 0.0
        %793 = vmatprep.subr.mxu0 0.0
        %794 = vmatpush2.msra.mxu0 0.0
        %795 = vmatprep.subr.mxu0 0.0
        %796 = vmatpush2.msra.mxu0 0.0
        %797 = vmatprep.subr.mxu0 0.0
        %798 = vmatpush2.msra.mxu0 0.0
        %799 = vmatprep.subr.mxu0 0.0
        %800 = vmatpush2.msra.mxu0 0.0
        %801 = vmatprep.subr.mxu0 0.0
        %802 = vmatpush2.msra.mxu0 0.0
        %803 = vmatprep.mubr.f32.mxu0 0.0
        %804 = vmatmul.mubr.f32.gmra.mxu0 %v585
        %v805 = vpop.f32.mrf.mxu0
        %v806 = vadd.f32 0.0, %v805
        %v807 = vpop.f32.mrf.mxu0
        %808 = vmatprep.mubr.f32.mxu0 0.0
        %809 = vmatmul.mubr.f32.gmra.mxu0 %v588
        %v810 = vpop.f32.mrf.mxu0
        %v811 = vadd.f32 0.0, %v810
        %v812 = vpop.f32.mrf.mxu0
        %813 = vdwg.mxu0
        %v814 = vadd.f32 %v731, %v806
        %v815 = vadd.f32 %v736, %v811
        %v817 = vlaneseq
        %v818 = vshrl.u32 %v817, 7
        %v819 = vsub.s32 0, %v818
        %v820 = vrot.slane %v574, %v819
        %v822 = vadd.f32 %v814, %v820
        %v823 = vadd.f32 %v815, %v820
        %v824 = vadd.f32 %v822, %v522
        %v825 = vadd.f32 %v823, %v523
        %v826 = vtanh.pop %v824
        %v827 = vtanh.pop %v825
        %s828 = scalar_lea.vmem [#allocation5], 768
        %v829 = vld [vmem:[%s828] sm:$0xff]
        %v830 = vld [vmem:[%s828 + $0x8] sm:$0xff]
        %v831 = vld [vmem:[%s828 + $0x10] sm:$0xff]
        %v832 = vld [vmem:[%s828 + $0x18] sm:$0xff]
        %v833 = vld [vmem:[%s828 + $0x20] sm:$0xff]
        %v834 = vld [vmem:[%s828 + $0x28] sm:$0xff]
        %v835 = vld [vmem:[%s828 + $0x30] sm:$0xff]
        %v836 = vld [vmem:[%s828 + $0x38] sm:$0xff]
        %v837 = vld [vmem:[%s828 + $0x40] sm:$0xff]
        %v838 = vld [vmem:[%s828 + $0x48] sm:$0xff]
        %v839 = vld [vmem:[%s828 + $0x50] sm:$0xff]
        %v840 = vld [vmem:[%s828 + $0x58] sm:$0xff]
        %v841 = vld [vmem:[%s828 + $0x60] sm:$0xff]
        %v842 = vld [vmem:[%s828 + $0x68] sm:$0xff]
        %v843 = vld [vmem:[%s828 + $0x70] sm:$0xff]
        %v844 = vld [vmem:[%s828 + $0x78] sm:$0xff]
        %v845 = vld [vmem:[%s828 + $0x80] sm:$0xff]
        %v846 = vld [vmem:[%s828 + $0x88] sm:$0xff]
        %v847 = vld [vmem:[%s828 + $0x90] sm:$0xff]
        %v848 = vld [vmem:[%s828 + $0x98] sm:$0xff]
        %v849 = vld [vmem:[%s828 + $0xa0] sm:$0xff]
        %v850 = vld [vmem:[%s828 + $0xa8] sm:$0xff]
        %v851 = vld [vmem:[%s828 + $0xb0] sm:$0xff]
        %v852 = vld [vmem:[%s828 + $0xb8] sm:$0xff]
        %v853 = vld [vmem:[%s828 + $0xc0] sm:$0xff]
        %v854 = vld [vmem:[%s828 + $0xc8] sm:$0xff]
        %v855 = vld [vmem:[%s828 + $0xd0] sm:$0xff]
        %v856 = vld [vmem:[%s828 + $0xd8] sm:$0xff]
        %v857 = vld [vmem:[%s828 + $0xe0] sm:$0xff]
        %v858 = vld [vmem:[%s828 + $0xe8] sm:$0xff]
        %v859 = vld [vmem:[%s828 + $0xf0] sm:$0xff]
        %v860 = vld [vmem:[%s828 + $0xf8] sm:$0xff]
        %v861 = vld [vmem:[%s828 + $0x100] sm:$0xff]
        %v862 = vld [vmem:[%s828 + $0x108] sm:$0xff]
        %v863 = vld [vmem:[%s828 + $0x110] sm:$0xff]
        %v864 = vld [vmem:[%s828 + $0x118] sm:$0xff]
        %v865 = vld [vmem:[%s828 + $0x120] sm:$0xff]
        %v866 = vld [vmem:[%s828 + $0x128] sm:$0xff]
        %v867 = vld [vmem:[%s828 + $0x130] sm:$0xff]
        %v868 = vld [vmem:[%s828 + $0x138] sm:$0xff]
        %v869 = vld [vmem:[%s828 + $0x140] sm:$0xff]
        %v870 = vld [vmem:[%s828 + $0x148] sm:$0xff]
        %v871 = vld [vmem:[%s828 + $0x150] sm:$0xff]
        %v872 = vld [vmem:[%s828 + $0x158] sm:$0xff]
        %v873 = vld [vmem:[%s828 + $0x160] sm:$0xff]
        %v874 = vld [vmem:[%s828 + $0x168] sm:$0xff]
        %v875 = vld [vmem:[%s828 + $0x170] sm:$0xff]
        %v876 = vld [vmem:[%s828 + $0x178] sm:$0xff]
        %s877 = scalar_lea.vmem [#allocation7], 2
        %v878 = vld [vmem:[%s877] sm:$0x1]
        %v881 = vrot.slane %v826, 7
        %v882 = vrot.slane %v827, 7
        %v883 = vsel %vm271, %v881, %v882
        %v886 = vsel %vm271, 0.0, %v881
        %v887 = vrot.slane %v826, 1
        %v888 = vrot.slane %v827, 1
        %v889 = vsel %vm278, %v887, %v888
        %v892 = vsel %vm278, %v888, 0.0
        %893 = vmatprep.subr.mxu0 0.0
        %894 = vmatpush1.msra.mxu0 %v860
        %895 = vmatprep.subr.mxu0 0.0
        %896 = vmatpush1.msra.mxu0 %v859
        %897 = vmatprep.subr.mxu0 0.0
        %898 = vmatpush1.msra.mxu0 %v858
        %899 = vmatprep.subr.mxu0 0.0
        %900 = vmatpush1.msra.mxu0 %v857
        %901 = vmatprep.subr.mxu0 0.0
        %902 = vmatpush1.msra.mxu0 %v856
        %903 = vmatprep.subr.mxu0 0.0
        %904 = vmatpush1.msra.mxu0 %v855
        %905 = vmatprep.subr.mxu0 0.0
        %906 = vmatpush1.msra.mxu0 %v854
        %907 = vmatprep.subr.mxu0 0.0
        %908 = vmatpush1.msra.mxu0 %v853
        %909 = vmatprep.subr.mxu0 0.0
        %910 = vmatpush1.msra.mxu0 %v852
        %911 = vmatprep.subr.mxu0 0.0
        %912 = vmatpush1.msra.mxu0 %v851
        %913 = vmatprep.subr.mxu0 0.0
        %914 = vmatpush1.msra.mxu0 %v850
        %915 = vmatprep.subr.mxu0 0.0
        %916 = vmatpush1.msra.mxu0 %v849
        %917 = vmatprep.subr.mxu0 0.0
        %918 = vmatpush1.msra.mxu0 %v848
        %919 = vmatprep.subr.mxu0 0.0
        %920 = vmatpush1.msra.mxu0 %v847
        %921 = vmatprep.subr.mxu0 0.0
        %922 = vmatpush1.msra.mxu0 %v846
        %923 = vmatprep.subr.mxu0 0.0
        %924 = vmatpush1.msra.mxu0 %v845
        %925 = vmatprep.subr.mxu0 0.0
        %926 = vmatpush2.msra.mxu0 0.0
        %927 = vmatprep.subr.mxu0 0.0
        %928 = vmatpush2.msra.mxu0 0.0
        %929 = vmatprep.subr.mxu0 0.0
        %930 = vmatpush2.msra.mxu0 0.0
        %931 = vmatprep.subr.mxu0 0.0
        %932 = vmatpush2.msra.mxu0 0.0
        %933 = vmatprep.subr.mxu0 0.0
        %934 = vmatpush2.msra.mxu0 0.0
        %935 = vmatprep.subr.mxu0 0.0
        %936 = vmatpush2.msra.mxu0 0.0
        %937 = vmatprep.subr.mxu0 0.0
        %938 = vmatpush2.msra.mxu0 0.0
        %939 = vmatprep.subr.mxu0 0.0
        %940 = vmatpush2.msra.mxu0 0.0
        %941 = vmatprep.subr.mxu0 0.0
        %942 = vmatpush2.msra.mxu0 0.0
        %943 = vmatprep.subr.mxu0 0.0
        %944 = vmatpush2.msra.mxu0 0.0
        %945 = vmatprep.subr.mxu0 0.0
        %946 = vmatpush2.msra.mxu0 0.0
        %947 = vmatprep.subr.mxu0 0.0
        %948 = vmatpush2.msra.mxu0 0.0
        %949 = vmatprep.subr.mxu0 0.0
        %950 = vmatpush2.msra.mxu0 0.0
        %951 = vmatprep.subr.mxu0 0.0
        %952 = vmatpush2.msra.mxu0 0.0
        %953 = vmatprep.subr.mxu0 0.0
        %954 = vmatpush2.msra.mxu0 0.0
        %955 = vmatprep.subr.mxu0 0.0
        %956 = vmatpush2.msra.mxu0 0.0
        %957 = vmatprep.mubr.f32.mxu0 0.0
        %958 = vmatmul.mubr.f32.gmra.mxu0 %v826
        %v959 = vpop.f32.mrf.mxu0
        %v960 = vadd.f32 0.0, %v959
        %v961 = vpop.f32.mrf.mxu0
        %962 = vmatprep.mubr.f32.mxu0 0.0
        %963 = vmatmul.mubr.f32.gmra.mxu0 %v827
        %v964 = vpop.f32.mrf.mxu0
        %v965 = vadd.f32 0.0, %v964
        %v966 = vpop.f32.mrf.mxu0
        %967 = vdwg.mxu0
        %968 = vmatprep.subr.mxu0 0.0
        %969 = vmatpush1.msra.mxu0 %v844
        %970 = vmatprep.subr.mxu0 0.0
        %971 = vmatpush1.msra.mxu0 %v843
        %972 = vmatprep.subr.mxu0 0.0
        %973 = vmatpush1.msra.mxu0 %v842
        %974 = vmatprep.subr.mxu0 0.0
        %975 = vmatpush1.msra.mxu0 %v841
        %976 = vmatprep.subr.mxu0 0.0
        %977 = vmatpush1.msra.mxu0 %v840
        %978 = vmatprep.subr.mxu0 0.0
        %979 = vmatpush1.msra.mxu0 %v839
        %980 = vmatprep.subr.mxu0 0.0
        %981 = vmatpush1.msra.mxu0 %v838
        %982 = vmatprep.subr.mxu0 0.0
        %983 = vmatpush1.msra.mxu0 %v837
        %984 = vmatprep.subr.mxu0 0.0
        %985 = vmatpush1.msra.mxu0 %v836
        %986 = vmatprep.subr.mxu0 0.0
        %987 = vmatpush1.msra.mxu0 %v835
        %988 = vmatprep.subr.mxu0 0.0
        %989 = vmatpush1.msra.mxu0 %v834
        %990 = vmatprep.subr.mxu0 0.0
        %991 = vmatpush1.msra.mxu0 %v833
        %992 = vmatprep.subr.mxu0 0.0
        %993 = vmatpush1.msra.mxu0 %v832
        %994 = vmatprep.subr.mxu0 0.0
        %995 = vmatpush1.msra.mxu0 %v831
        %996 = vmatprep.subr.mxu0 0.0
        %997 = vmatpush1.msra.mxu0 %v830
        %998 = vmatprep.subr.mxu0 0.0
        %999 = vmatpush1.msra.mxu0 %v829
        %1000 = vmatprep.subr.mxu0 0.0
        %1001 = vmatpush2.msra.mxu0 0.0
        %1002 = vmatprep.subr.mxu0 0.0
        %1003 = vmatpush2.msra.mxu0 0.0
        %1004 = vmatprep.subr.mxu0 0.0
        %1005 = vmatpush2.msra.mxu0 0.0
        %1006 = vmatprep.subr.mxu0 0.0
        %1007 = vmatpush2.msra.mxu0 0.0
        %1008 = vmatprep.subr.mxu0 0.0
        %1009 = vmatpush2.msra.mxu0 0.0
        %1010 = vmatprep.subr.mxu0 0.0
        %1011 = vmatpush2.msra.mxu0 0.0
        %1012 = vmatprep.subr.mxu0 0.0
        %1013 = vmatpush2.msra.mxu0 0.0
        %1014 = vmatprep.subr.mxu0 0.0
        %1015 = vmatpush2.msra.mxu0 0.0
        %1016 = vmatprep.subr.mxu0 0.0
        %1017 = vmatpush2.msra.mxu0 0.0
        %1018 = vmatprep.subr.mxu0 0.0
        %1019 = vmatpush2.msra.mxu0 0.0
        %1020 = vmatprep.subr.mxu0 0.0
        %1021 = vmatpush2.msra.mxu0 0.0
        %1022 = vmatprep.subr.mxu0 0.0
        %1023 = vmatpush2.msra.mxu0 0.0
        %1024 = vmatprep.subr.mxu0 0.0
        %1025 = vmatpush2.msra.mxu0 0.0
        %1026 = vmatprep.subr.mxu0 0.0
        %1027 = vmatpush2.msra.mxu0 0.0
        %1028 = vmatprep.subr.mxu0 0.0
        %1029 = vmatpush2.msra.mxu0 0.0
        %1030 = vmatprep.subr.mxu0 0.0
        %1031 = vmatpush2.msra.mxu0 0.0
        %1032 = vmatprep.mubr.f32.mxu0 0.0
        %1033 = vmatmul.mubr.f32.gmra.mxu0 %v886
        %v1034 = vpop.f32.mrf.mxu0
        %v1035 = vadd.f32 %v960, %v1034
        %v1036 = vpop.f32.mrf.mxu0
        %1037 = vmatprep.mubr.f32.mxu0 0.0
        %1038 = vmatmul.mubr.f32.gmra.mxu0 %v883
        %v1039 = vpop.f32.mrf.mxu0
        %v1040 = vadd.f32 %v965, %v1039
        %v1041 = vpop.f32.mrf.mxu0
        %1042 = vdwg.mxu0
        %1043 = vmatprep.subr.mxu0 0.0
        %1044 = vmatpush1.msra.mxu0 %v876
        %1045 = vmatprep.subr.mxu0 0.0
        %1046 = vmatpush1.msra.mxu0 %v875
        %1047 = vmatprep.subr.mxu0 0.0
        %1048 = vmatpush1.msra.mxu0 %v874
        %1049 = vmatprep.subr.mxu0 0.0
        %1050 = vmatpush1.msra.mxu0 %v873
        %1051 = vmatprep.subr.mxu0 0.0
        %1052 = vmatpush1.msra.mxu0 %v872
        %1053 = vmatprep.subr.mxu0 0.0
        %1054 = vmatpush1.msra.mxu0 %v871
        %1055 = vmatprep.subr.mxu0 0.0
        %1056 = vmatpush1.msra.mxu0 %v870
        %1057 = vmatprep.subr.mxu0 0.0
        %1058 = vmatpush1.msra.mxu0 %v869
        %1059 = vmatprep.subr.mxu0 0.0
        %1060 = vmatpush1.msra.mxu0 %v868
        %1061 = vmatprep.subr.mxu0 0.0
        %1062 = vmatpush1.msra.mxu0 %v867
        %1063 = vmatprep.subr.mxu0 0.0
        %1064 = vmatpush1.msra.mxu0 %v866
        %1065 = vmatprep.subr.mxu0 0.0
        %1066 = vmatpush1.msra.mxu0 %v865
        %1067 = vmatprep.subr.mxu0 0.0
        %1068 = vmatpush1.msra.mxu0 %v864
        %1069 = vmatprep.subr.mxu0 0.0
        %1070 = vmatpush1.msra.mxu0 %v863
        %1071 = vmatprep.subr.mxu0 0.0
        %1072 = vmatpush1.msra.mxu0 %v862
        %1073 = vmatprep.subr.mxu0 0.0
        %1074 = vmatpush1.msra.mxu0 %v861
        %1075 = vmatprep.subr.mxu0 0.0
        %1076 = vmatpush2.msra.mxu0 0.0
        %1077 = vmatprep.subr.mxu0 0.0
        %1078 = vmatpush2.msra.mxu0 0.0
        %1079 = vmatprep.subr.mxu0 0.0
        %1080 = vmatpush2.msra.mxu0 0.0
        %1081 = vmatprep.subr.mxu0 0.0
        %1082 = vmatpush2.msra.mxu0 0.0
        %1083 = vmatprep.subr.mxu0 0.0
        %1084 = vmatpush2.msra.mxu0 0.0
        %1085 = vmatprep.subr.mxu0 0.0
        %1086 = vmatpush2.msra.mxu0 0.0
        %1087 = vmatprep.subr.mxu0 0.0
        %1088 = vmatpush2.msra.mxu0 0.0
        %1089 = vmatprep.subr.mxu0 0.0
        %1090 = vmatpush2.msra.mxu0 0.0
        %1091 = vmatprep.subr.mxu0 0.0
        %1092 = vmatpush2.msra.mxu0 0.0
        %1093 = vmatprep.subr.mxu0 0.0
        %1094 = vmatpush2.msra.mxu0 0.0
        %1095 = vmatprep.subr.mxu0 0.0
        %1096 = vmatpush2.msra.mxu0 0.0
        %1097 = vmatprep.subr.mxu0 0.0
        %1098 = vmatpush2.msra.mxu0 0.0
        %1099 = vmatprep.subr.mxu0 0.0
        %1100 = vmatpush2.msra.mxu0 0.0
        %1101 = vmatprep.subr.mxu0 0.0
        %1102 = vmatpush2.msra.mxu0 0.0
        %1103 = vmatprep.subr.mxu0 0.0
        %1104 = vmatpush2.msra.mxu0 0.0
        %1105 = vmatprep.subr.mxu0 0.0
        %1106 = vmatpush2.msra.mxu0 0.0
        %1107 = vmatprep.mubr.f32.mxu0 0.0
        %1108 = vmatmul.mubr.f32.gmra.mxu0 %v889
        %v1109 = vpop.f32.mrf.mxu0
        %v1110 = vadd.f32 0.0, %v1109
        %v1111 = vpop.f32.mrf.mxu0
        %1112 = vmatprep.mubr.f32.mxu0 0.0
        %1113 = vmatmul.mubr.f32.gmra.mxu0 %v892
        %v1114 = vpop.f32.mrf.mxu0
        %v1115 = vadd.f32 0.0, %v1114
        %v1116 = vpop.f32.mrf.mxu0
        %1117 = vdwg.mxu0
        %v1118 = vadd.f32 %v1035, %v1110
        %v1119 = vadd.f32 %v1040, %v1115
        %v1121 = vlaneseq
        %v1122 = vshrl.u32 %v1121, 7
        %v1123 = vsub.s32 0, %v1122
        %v1124 = vrot.slane %v878, %v1123
        %v1126 = vadd.f32 %v1118, %v1124
        %v1127 = vadd.f32 %v1119, %v1124
        %v1128 = vadd.f32 %v1126, %v826
        %v1129 = vadd.f32 %v1127, %v827
        %v1130 = vtanh.pop %v1128
        %v1131 = vtanh.pop %v1129
        %s1132 = scalar_lea.vmem [#allocation5], 1152
        %v1133 = vld [vmem:[%s1132] sm:$0xff]
        %v1134 = vld [vmem:[%s1132 + $0x8] sm:$0xff]
        %v1135 = vld [vmem:[%s1132 + $0x10] sm:$0xff]
        %v1136 = vld [vmem:[%s1132 + $0x18] sm:$0xff]
        %v1137 = vld [vmem:[%s1132 + $0x20] sm:$0xff]
        %v1138 = vld [vmem:[%s1132 + $0x28] sm:$0xff]
        %v1139 = vld [vmem:[%s1132 + $0x30] sm:$0xff]
        %v1140 = vld [vmem:[%s1132 + $0x38] sm:$0xff]
        %v1141 = vld [vmem:[%s1132 + $0x40] sm:$0xff]
        %v1142 = vld [vmem:[%s1132 + $0x48] sm:$0xff]
        %v1143 = vld [vmem:[%s1132 + $0x50] sm:$0xff]
        %v1144 = vld [vmem:[%s1132 + $0x58] sm:$0xff]
        %v1145 = vld [vmem:[%s1132 + $0x60] sm:$0xff]
        %v1146 = vld [vmem:[%s1132 + $0x68] sm:$0xff]
        %v1147 = vld [vmem:[%s1132 + $0x70] sm:$0xff]
        %v1148 = vld [vmem:[%s1132 + $0x78] sm:$0xff]
        %v1149 = vld [vmem:[%s1132 + $0x80] sm:$0xff]
        %v1150 = vld [vmem:[%s1132 + $0x88] sm:$0xff]
        %v1151 = vld [vmem:[%s1132 + $0x90] sm:$0xff]
        %v1152 = vld [vmem:[%s1132 + $0x98] sm:$0xff]
        %v1153 = vld [vmem:[%s1132 + $0xa0] sm:$0xff]
        %v1154 = vld [vmem:[%s1132 + $0xa8] sm:$0xff]
        %v1155 = vld [vmem:[%s1132 + $0xb0] sm:$0xff]
        %v1156 = vld [vmem:[%s1132 + $0xb8] sm:$0xff]
        %v1157 = vld [vmem:[%s1132 + $0xc0] sm:$0xff]
        %v1158 = vld [vmem:[%s1132 + $0xc8] sm:$0xff]
        %v1159 = vld [vmem:[%s1132 + $0xd0] sm:$0xff]
        %v1160 = vld [vmem:[%s1132 + $0xd8] sm:$0xff]
        %v1161 = vld [vmem:[%s1132 + $0xe0] sm:$0xff]
        %v1162 = vld [vmem:[%s1132 + $0xe8] sm:$0xff]
        %v1163 = vld [vmem:[%s1132 + $0xf0] sm:$0xff]
        %v1164 = vld [vmem:[%s1132 + $0xf8] sm:$0xff]
        %v1165 = vld [vmem:[%s1132 + $0x100] sm:$0xff]
        %v1166 = vld [vmem:[%s1132 + $0x108] sm:$0xff]
        %v1167 = vld [vmem:[%s1132 + $0x110] sm:$0xff]
        %v1168 = vld [vmem:[%s1132 + $0x118] sm:$0xff]
        %v1169 = vld [vmem:[%s1132 + $0x120] sm:$0xff]
        %v1170 = vld [vmem:[%s1132 + $0x128] sm:$0xff]
        %v1171 = vld [vmem:[%s1132 + $0x130] sm:$0xff]
        %v1172 = vld [vmem:[%s1132 + $0x138] sm:$0xff]
        %v1173 = vld [vmem:[%s1132 + $0x140] sm:$0xff]
        %v1174 = vld [vmem:[%s1132 + $0x148] sm:$0xff]
        %v1175 = vld [vmem:[%s1132 + $0x150] sm:$0xff]
        %v1176 = vld [vmem:[%s1132 + $0x158] sm:$0xff]
        %v1177 = vld [vmem:[%s1132 + $0x160] sm:$0xff]
        %v1178 = vld [vmem:[%s1132 + $0x168] sm:$0xff]
        %v1179 = vld [vmem:[%s1132 + $0x170] sm:$0xff]
        %v1180 = vld [vmem:[%s1132 + $0x178] sm:$0xff]
        %s1181 = scalar_lea.vmem [#allocation7], 3
        %v1182 = vld [vmem:[%s1181] sm:$0x1]
        %v1185 = vrot.slane %v1130, 7
        %v1186 = vrot.slane %v1131, 7
        %v1187 = vsel %vm271, %v1185, %v1186
        %v1190 = vsel %vm271, 0.0, %v1185
        %v1191 = vrot.slane %v1130, 1
        %v1192 = vrot.slane %v1131, 1
        %v1193 = vsel %vm278, %v1191, %v1192
        %v1196 = vsel %vm278, %v1192, 0.0
        %1197 = vmatprep.subr.mxu0 0.0
        %1198 = vmatpush1.msra.mxu0 %v1164
        %1199 = vmatprep.subr.mxu0 0.0
        %1200 = vmatpush1.msra.mxu0 %v1163
        %1201 = vmatprep.subr.mxu0 0.0
        %1202 = vmatpush1.msra.mxu0 %v1162
        %1203 = vmatprep.subr.mxu0 0.0
        %1204 = vmatpush1.msra.mxu0 %v1161
        %1205 = vmatprep.subr.mxu0 0.0
        %1206 = vmatpush1.msra.mxu0 %v1160
        %1207 = vmatprep.subr.mxu0 0.0
        %1208 = vmatpush1.msra.mxu0 %v1159
        %1209 = vmatprep.subr.mxu0 0.0
        %1210 = vmatpush1.msra.mxu0 %v1158
        %1211 = vmatprep.subr.mxu0 0.0
        %1212 = vmatpush1.msra.mxu0 %v1157
        %1213 = vmatprep.subr.mxu0 0.0
        %1214 = vmatpush1.msra.mxu0 %v1156
        %1215 = vmatprep.subr.mxu0 0.0
        %1216 = vmatpush1.msra.mxu0 %v1155
        %1217 = vmatprep.subr.mxu0 0.0
        %1218 = vmatpush1.msra.mxu0 %v1154
        %1219 = vmatprep.subr.mxu0 0.0
        %1220 = vmatpush1.msra.mxu0 %v1153
        %1221 = vmatprep.subr.mxu0 0.0
        %1222 = vmatpush1.msra.mxu0 %v1152
        %1223 = vmatprep.subr.mxu0 0.0
        %1224 = vmatpush1.msra.mxu0 %v1151
        %1225 = vmatprep.subr.mxu0 0.0
        %1226 = vmatpush1.msra.mxu0 %v1150
        %1227 = vmatprep.subr.mxu0 0.0
        %1228 = vmatpush1.msra.mxu0 %v1149
        %1229 = vmatprep.subr.mxu0 0.0
        %1230 = vmatpush2.msra.mxu0 0.0
        %1231 = vmatprep.subr.mxu0 0.0
        %1232 = vmatpush2.msra.mxu0 0.0
        %1233 = vmatprep.subr.mxu0 0.0
        %1234 = vmatpush2.msra.mxu0 0.0
        %1235 = vmatprep.subr.mxu0 0.0
        %1236 = vmatpush2.msra.mxu0 0.0
        %1237 = vmatprep.subr.mxu0 0.0
        %1238 = vmatpush2.msra.mxu0 0.0
        %1239 = vmatprep.subr.mxu0 0.0
        %1240 = vmatpush2.msra.mxu0 0.0
        %1241 = vmatprep.subr.mxu0 0.0
        %1242 = vmatpush2.msra.mxu0 0.0
        %1243 = vmatprep.subr.mxu0 0.0
        %1244 = vmatpush2.msra.mxu0 0.0
        %1245 = vmatprep.subr.mxu0 0.0
        %1246 = vmatpush2.msra.mxu0 0.0
        %1247 = vmatprep.subr.mxu0 0.0
        %1248 = vmatpush2.msra.mxu0 0.0
        %1249 = vmatprep.subr.mxu0 0.0
        %1250 = vmatpush2.msra.mxu0 0.0
        %1251 = vmatprep.subr.mxu0 0.0
        %1252 = vmatpush2.msra.mxu0 0.0
        %1253 = vmatprep.subr.mxu0 0.0
        %1254 = vmatpush2.msra.mxu0 0.0
        %1255 = vmatprep.subr.mxu0 0.0
        %1256 = vmatpush2.msra.mxu0 0.0
        %1257 = vmatprep.subr.mxu0 0.0
        %1258 = vmatpush2.msra.mxu0 0.0
        %1259 = vmatprep.subr.mxu0 0.0
        %1260 = vmatpush2.msra.mxu0 0.0
        %1261 = vmatprep.mubr.f32.mxu0 0.0
        %1262 = vmatmul.mubr.f32.gmra.mxu0 %v1130
        %v1263 = vpop.f32.mrf.mxu0
        %v1264 = vadd.f32 0.0, %v1263
        %v1265 = vpop.f32.mrf.mxu0
        %1266 = vmatprep.mubr.f32.mxu0 0.0
        %1267 = vmatmul.mubr.f32.gmra.mxu0 %v1131
        %v1268 = vpop.f32.mrf.mxu0
        %v1269 = vadd.f32 0.0, %v1268
        %v1270 = vpop.f32.mrf.mxu0
        %1271 = vdwg.mxu0
        %1272 = vmatprep.subr.mxu0 0.0
        %1273 = vmatpush1.msra.mxu0 %v1148
        %1274 = vmatprep.subr.mxu0 0.0
        %1275 = vmatpush1.msra.mxu0 %v1147
        %1276 = vmatprep.subr.mxu0 0.0
        %1277 = vmatpush1.msra.mxu0 %v1146
        %1278 = vmatprep.subr.mxu0 0.0
        %1279 = vmatpush1.msra.mxu0 %v1145
        %1280 = vmatprep.subr.mxu0 0.0
        %1281 = vmatpush1.msra.mxu0 %v1144
        %1282 = vmatprep.subr.mxu0 0.0
        %1283 = vmatpush1.msra.mxu0 %v1143
        %1284 = vmatprep.subr.mxu0 0.0
        %1285 = vmatpush1.msra.mxu0 %v1142
        %1286 = vmatprep.subr.mxu0 0.0
        %1287 = vmatpush1.msra.mxu0 %v1141
        %1288 = vmatprep.subr.mxu0 0.0
        %1289 = vmatpush1.msra.mxu0 %v1140
        %1290 = vmatprep.subr.mxu0 0.0
        %1291 = vmatpush1.msra.mxu0 %v1139
        %1292 = vmatprep.subr.mxu0 0.0
        %1293 = vmatpush1.msra.mxu0 %v1138
        %1294 = vmatprep.subr.mxu0 0.0
        %1295 = vmatpush1.msra.mxu0 %v1137
        %1296 = vmatprep.subr.mxu0 0.0
        %1297 = vmatpush1.msra.mxu0 %v1136
        %1298 = vmatprep.subr.mxu0 0.0
        %1299 = vmatpush1.msra.mxu0 %v1135
        %1300 = vmatprep.subr.mxu0 0.0
        %1301 = vmatpush1.msra.mxu0 %v1134
        %1302 = vmatprep.subr.mxu0 0.0
        %1303 = vmatpush1.msra.mxu0 %v1133
        %1304 = vmatprep.subr.mxu0 0.0
        %1305 = vmatpush2.msra.mxu0 0.0
        %1306 = vmatprep.subr.mxu0 0.0
        %1307 = vmatpush2.msra.mxu0 0.0
        %1308 = vmatprep.subr.mxu0 0.0
        %1309 = vmatpush2.msra.mxu0 0.0
        %1310 = vmatprep.subr.mxu0 0.0
        %1311 = vmatpush2.msra.mxu0 0.0
        %1312 = vmatprep.subr.mxu0 0.0
        %1313 = vmatpush2.msra.mxu0 0.0
        %1314 = vmatprep.subr.mxu0 0.0
        %1315 = vmatpush2.msra.mxu0 0.0
        %1316 = vmatprep.subr.mxu0 0.0
        %1317 = vmatpush2.msra.mxu0 0.0
        %1318 = vmatprep.subr.mxu0 0.0
        %1319 = vmatpush2.msra.mxu0 0.0
        %1320 = vmatprep.subr.mxu0 0.0
        %1321 = vmatpush2.msra.mxu0 0.0
        %1322 = vmatprep.subr.mxu0 0.0
        %1323 = vmatpush2.msra.mxu0 0.0
        %1324 = vmatprep.subr.mxu0 0.0
        %1325 = vmatpush2.msra.mxu0 0.0
        %1326 = vmatprep.subr.mxu0 0.0
        %1327 = vmatpush2.msra.mxu0 0.0
        %1328 = vmatprep.subr.mxu0 0.0
        %1329 = vmatpush2.msra.mxu0 0.0
        %1330 = vmatprep.subr.mxu0 0.0
        %1331 = vmatpush2.msra.mxu0 0.0
        %1332 = vmatprep.subr.mxu0 0.0
        %1333 = vmatpush2.msra.mxu0 0.0
        %1334 = vmatprep.subr.mxu0 0.0
        %1335 = vmatpush2.msra.mxu0 0.0
        %1336 = vmatprep.mubr.f32.mxu0 0.0
        %1337 = vmatmul.mubr.f32.gmra.mxu0 %v1190
        %v1338 = vpop.f32.mrf.mxu0
        %v1339 = vadd.f32 %v1264, %v1338
        %v1340 = vpop.f32.mrf.mxu0
        %1341 = vmatprep.mubr.f32.mxu0 0.0
        %1342 = vmatmul.mubr.f32.gmra.mxu0 %v1187
        %v1343 = vpop.f32.mrf.mxu0
        %v1344 = vadd.f32 %v1269, %v1343
        %v1345 = vpop.f32.mrf.mxu0
        %1346 = vdwg.mxu0
        %1347 = vmatprep.subr.mxu0 0.0
        %1348 = vmatpush1.msra.mxu0 %v1180
        %1349 = vmatprep.subr.mxu0 0.0
        %1350 = vmatpush1.msra.mxu0 %v1179
        %1351 = vmatprep.subr.mxu0 0.0
        %1352 = vmatpush1.msra.mxu0 %v1178
        %1353 = vmatprep.subr.mxu0 0.0
        %1354 = vmatpush1.msra.mxu0 %v1177
        %1355 = vmatprep.subr.mxu0 0.0
        %1356 = vmatpush1.msra.mxu0 %v1176
        %1357 = vmatprep.subr.mxu0 0.0
        %1358 = vmatpush1.msra.mxu0 %v1175
        %1359 = vmatprep.subr.mxu0 0.0
        %1360 = vmatpush1.msra.mxu0 %v1174
        %1361 = vmatprep.subr.mxu0 0.0
        %1362 = vmatpush1.msra.mxu0 %v1173
        %1363 = vmatprep.subr.mxu0 0.0
        %1364 = vmatpush1.msra.mxu0 %v1172
        %1365 = vmatprep.subr.mxu0 0.0
        %1366 = vmatpush1.msra.mxu0 %v1171
        %1367 = vmatprep.subr.mxu0 0.0
        %1368 = vmatpush1.msra.mxu0 %v1170
        %1369 = vmatprep.subr.mxu0 0.0
        %1370 = vmatpush1.msra.mxu0 %v1169
        %1371 = vmatprep.subr.mxu0 0.0
        %1372 = vmatpush1.msra.mxu0 %v1168
        %1373 = vmatprep.subr.mxu0 0.0
        %1374 = vmatpush1.msra.mxu0 %v1167
        %1375 = vmatprep.subr.mxu0 0.0
        %1376 = vmatpush1.msra.mxu0 %v1166
        %1377 = vmatprep.subr.mxu0 0.0
        %1378 = vmatpush1.msra.mxu0 %v1165
        %1379 = vmatprep.subr.mxu0 0.0
        %1380 = vmatpush2.msra.mxu0 0.0
        %1381 = vmatprep.subr.mxu0 0.0
        %1382 = vmatpush2.msra.mxu0 0.0
        %1383 = vmatprep.subr.mxu0 0.0
        %1384 = vmatpush2.msra.mxu0 0.0
        %1385 = vmatprep.subr.mxu0 0.0
        %1386 = vmatpush2.msra.mxu0 0.0
        %1387 = vmatprep.subr.mxu0 0.0
        %1388 = vmatpush2.msra.mxu0 0.0
        %1389 = vmatprep.subr.mxu0 0.0
        %1390 = vmatpush2.msra.mxu0 0.0
        %1391 = vmatprep.subr.mxu0 0.0
        %1392 = vmatpush2.msra.mxu0 0.0
        %1393 = vmatprep.subr.mxu0 0.0
        %1394 = vmatpush2.msra.mxu0 0.0
        %1395 = vmatprep.subr.mxu0 0.0
        %1396 = vmatpush2.msra.mxu0 0.0
        %1397 = vmatprep.subr.mxu0 0.0
        %1398 = vmatpush2.msra.mxu0 0.0
        %1399 = vmatprep.subr.mxu0 0.0
        %1400 = vmatpush2.msra.mxu0 0.0
        %1401 = vmatprep.subr.mxu0 0.0
        %1402 = vmatpush2.msra.mxu0 0.0
        %1403 = vmatprep.subr.mxu0 0.0
        %1404 = vmatpush2.msra.mxu0 0.0
        %1405 = vmatprep.subr.mxu0 0.0
        %1406 = vmatpush2.msra.mxu0 0.0
        %1407 = vmatprep.subr.mxu0 0.0
        %1408 = vmatpush2.msra.mxu0 0.0
        %1409 = vmatprep.subr.mxu0 0.0
        %1410 = vmatpush2.msra.mxu0 0.0
        %1411 = vmatprep.mubr.f32.mxu0 0.0
        %1412 = vmatmul.mubr.f32.gmra.mxu0 %v1193
        %v1413 = vpop.f32.mrf.mxu0
        %v1414 = vadd.f32 0.0, %v1413
        %v1415 = vpop.f32.mrf.mxu0
        %1416 = vmatprep.mubr.f32.mxu0 0.0
        %1417 = vmatmul.mubr.f32.gmra.mxu0 %v1196
        %v1418 = vpop.f32.mrf.mxu0
        %v1419 = vadd.f32 0.0, %v1418
        %v1420 = vpop.f32.mrf.mxu0
        %1421 = vdwg.mxu0
        %v1422 = vadd.f32 %v1339, %v1414
        %v1423 = vadd.f32 %v1344, %v1419
        %v1425 = vlaneseq
        %v1426 = vshrl.u32 %v1425, 7
        %v1427 = vsub.s32 0, %v1426
        %v1428 = vrot.slane %v1182, %v1427
        %v1430 = vadd.f32 %v1422, %v1428
        %v1431 = vadd.f32 %v1423, %v1428
        %v1432 = vadd.f32 %v1430, %v1130
        %v1433 = vadd.f32 %v1431, %v1131
        %v1434 = vtanh.pop %v1432
        %v1435 = vtanh.pop %v1433
        %s1436 = scalar_lea.vmem [#allocation5], 1536
        %v1437 = vld [vmem:[%s1436] sm:$0xff]
        %v1438 = vld [vmem:[%s1436 + $0x8] sm:$0xff]
        %v1439 = vld [vmem:[%s1436 + $0x10] sm:$0xff]
        %v1440 = vld [vmem:[%s1436 + $0x18] sm:$0xff]
        %v1441 = vld [vmem:[%s1436 + $0x20] sm:$0xff]
        %v1442 = vld [vmem:[%s1436 + $0x28] sm:$0xff]
        %v1443 = vld [vmem:[%s1436 + $0x30] sm:$0xff]
        %v1444 = vld [vmem:[%s1436 + $0x38] sm:$0xff]
        %v1445 = vld [vmem:[%s1436 + $0x40] sm:$0xff]
        %v1446 = vld [vmem:[%s1436 + $0x48] sm:$0xff]
        %v1447 = vld [vmem:[%s1436 + $0x50] sm:$0xff]
        %v1448 = vld [vmem:[%s1436 + $0x58] sm:$0xff]
        %v1449 = vld [vmem:[%s1436 + $0x60] sm:$0xff]
        %v1450 = vld [vmem:[%s1436 + $0x68] sm:$0xff]
        %v1451 = vld [vmem:[%s1436 + $0x70] sm:$0xff]
        %v1452 = vld [vmem:[%s1436 + $0x78] sm:$0xff]
        %v1453 = vld [vmem:[%s1436 + $0x80] sm:$0xff]
        %v1454 = vld [vmem:[%s1436 + $0x88] sm:$0xff]
        %v1455 = vld [vmem:[%s1436 + $0x90] sm:$0xff]
        %v1456 = vld [vmem:[%s1436 + $0x98] sm:$0xff]
        %v1457 = vld [vmem:[%s1436 + $0xa0] sm:$0xff]
        %v1458 = vld [vmem:[%s1436 + $0xa8] sm:$0xff]
        %v1459 = vld [vmem:[%s1436 + $0xb0] sm:$0xff]
        %v1460 = vld [vmem:[%s1436 + $0xb8] sm:$0xff]
        %v1461 = vld [vmem:[%s1436 + $0xc0] sm:$0xff]
        %v1462 = vld [vmem:[%s1436 + $0xc8] sm:$0xff]
        %v1463 = vld [vmem:[%s1436 + $0xd0] sm:$0xff]
        %v1464 = vld [vmem:[%s1436 + $0xd8] sm:$0xff]
        %v1465 = vld [vmem:[%s1436 + $0xe0] sm:$0xff]
        %v1466 = vld [vmem:[%s1436 + $0xe8] sm:$0xff]
        %v1467 = vld [vmem:[%s1436 + $0xf0] sm:$0xff]
        %v1468 = vld [vmem:[%s1436 + $0xf8] sm:$0xff]
        %v1469 = vld [vmem:[%s1436 + $0x100] sm:$0xff]
        %v1470 = vld [vmem:[%s1436 + $0x108] sm:$0xff]
        %v1471 = vld [vmem:[%s1436 + $0x110] sm:$0xff]
        %v1472 = vld [vmem:[%s1436 + $0x118] sm:$0xff]
        %v1473 = vld [vmem:[%s1436 + $0x120] sm:$0xff]
        %v1474 = vld [vmem:[%s1436 + $0x128] sm:$0xff]
        %v1475 = vld [vmem:[%s1436 + $0x130] sm:$0xff]
        %v1476 = vld [vmem:[%s1436 + $0x138] sm:$0xff]
        %v1477 = vld [vmem:[%s1436 + $0x140] sm:$0xff]
        %v1478 = vld [vmem:[%s1436 + $0x148] sm:$0xff]
        %v1479 = vld [vmem:[%s1436 + $0x150] sm:$0xff]
        %v1480 = vld [vmem:[%s1436 + $0x158] sm:$0xff]
        %v1481 = vld [vmem:[%s1436 + $0x160] sm:$0xff]
        %v1482 = vld [vmem:[%s1436 + $0x168] sm:$0xff]
        %v1483 = vld [vmem:[%s1436 + $0x170] sm:$0xff]
        %v1484 = vld [vmem:[%s1436 + $0x178] sm:$0xff]
        %s1485 = scalar_lea.vmem [#allocation7], 4
        %v1486 = vld [vmem:[%s1485] sm:$0x1]
        %v1489 = vrot.slane %v1434, 7
        %v1490 = vrot.slane %v1435, 7
        %v1491 = vsel %vm271, %v1489, %v1490
        %v1494 = vsel %vm271, 0.0, %v1489
        %v1495 = vrot.slane %v1434, 1
        %v1496 = vrot.slane %v1435, 1
        %v1497 = vsel %vm278, %v1495, %v1496
        %v1500 = vsel %vm278, %v1496, 0.0
        %1501 = vmatprep.subr.mxu0 0.0
        %1502 = vmatpush1.msra.mxu0 %v1468
        %1503 = vmatprep.subr.mxu0 0.0
        %1504 = vmatpush1.msra.mxu0 %v1467
        %1505 = vmatprep.subr.mxu0 0.0
        %1506 = vmatpush1.msra.mxu0 %v1466
        %1507 = vmatprep.subr.mxu0 0.0
        %1508 = vmatpush1.msra.mxu0 %v1465
        %1509 = vmatprep.subr.mxu0 0.0
        %1510 = vmatpush1.msra.mxu0 %v1464
        %1511 = vmatprep.subr.mxu0 0.0
        %1512 = vmatpush1.msra.mxu0 %v1463
        %1513 = vmatprep.subr.mxu0 0.0
        %1514 = vmatpush1.msra.mxu0 %v1462
        %1515 = vmatprep.subr.mxu0 0.0
        %1516 = vmatpush1.msra.mxu0 %v1461
        %1517 = vmatprep.subr.mxu0 0.0
        %1518 = vmatpush1.msra.mxu0 %v1460
        %1519 = vmatprep.subr.mxu0 0.0
        %1520 = vmatpush1.msra.mxu0 %v1459
        %1521 = vmatprep.subr.mxu0 0.0
        %1522 = vmatpush1.msra.mxu0 %v1458
        %1523 = vmatprep.subr.mxu0 0.0
        %1524 = vmatpush1.msra.mxu0 %v1457
        %1525 = vmatprep.subr.mxu0 0.0
        %1526 = vmatpush1.msra.mxu0 %v1456
        %1527 = vmatprep.subr.mxu0 0.0
        %1528 = vmatpush1.msra.mxu0 %v1455
        %1529 = vmatprep.subr.mxu0 0.0
        %1530 = vmatpush1.msra.mxu0 %v1454
        %1531 = vmatprep.subr.mxu0 0.0
        %1532 = vmatpush1.msra.mxu0 %v1453
        %1533 = vmatprep.subr.mxu0 0.0
        %1534 = vmatpush2.msra.mxu0 0.0
        %1535 = vmatprep.subr.mxu0 0.0
        %1536 = vmatpush2.msra.mxu0 0.0
        %1537 = vmatprep.subr.mxu0 0.0
        %1538 = vmatpush2.msra.mxu0 0.0
        %1539 = vmatprep.subr.mxu0 0.0
        %1540 = vmatpush2.msra.mxu0 0.0
        %1541 = vmatprep.subr.mxu0 0.0
        %1542 = vmatpush2.msra.mxu0 0.0
        %1543 = vmatprep.subr.mxu0 0.0
        %1544 = vmatpush2.msra.mxu0 0.0
        %1545 = vmatprep.subr.mxu0 0.0
        %1546 = vmatpush2.msra.mxu0 0.0
        %1547 = vmatprep.subr.mxu0 0.0
        %1548 = vmatpush2.msra.mxu0 0.0
        %1549 = vmatprep.subr.mxu0 0.0
        %1550 = vmatpush2.msra.mxu0 0.0
        %1551 = vmatprep.subr.mxu0 0.0
        %1552 = vmatpush2.msra.mxu0 0.0
        %1553 = vmatprep.subr.mxu0 0.0
        %1554 = vmatpush2.msra.mxu0 0.0
        %1555 = vmatprep.subr.mxu0 0.0
        %1556 = vmatpush2.msra.mxu0 0.0
        %1557 = vmatprep.subr.mxu0 0.0
        %1558 = vmatpush2.msra.mxu0 0.0
        %1559 = vmatprep.subr.mxu0 0.0
        %1560 = vmatpush2.msra.mxu0 0.0
        %1561 = vmatprep.subr.mxu0 0.0
        %1562 = vmatpush2.msra.mxu0 0.0
        %1563 = vmatprep.subr.mxu0 0.0
        %1564 = vmatpush2.msra.mxu0 0.0
        %1565 = vmatprep.mubr.f32.mxu0 0.0
        %1566 = vmatmul.mubr.f32.gmra.mxu0 %v1434
        %v1567 = vpop.f32.mrf.mxu0
        %v1568 = vadd.f32 0.0, %v1567
        %v1569 = vpop.f32.mrf.mxu0
        %1570 = vmatprep.mubr.f32.mxu0 0.0
        %1571 = vmatmul.mubr.f32.gmra.mxu0 %v1435
        %v1572 = vpop.f32.mrf.mxu0
        %v1573 = vadd.f32 0.0, %v1572
        %v1574 = vpop.f32.mrf.mxu0
        %1575 = vdwg.mxu0
        %1576 = vmatprep.subr.mxu0 0.0
        %1577 = vmatpush1.msra.mxu0 %v1452
        %1578 = vmatprep.subr.mxu0 0.0
        %1579 = vmatpush1.msra.mxu0 %v1451
        %1580 = vmatprep.subr.mxu0 0.0
        %1581 = vmatpush1.msra.mxu0 %v1450
        %1582 = vmatprep.subr.mxu0 0.0
        %1583 = vmatpush1.msra.mxu0 %v1449
        %1584 = vmatprep.subr.mxu0 0.0
        %1585 = vmatpush1.msra.mxu0 %v1448
        %1586 = vmatprep.subr.mxu0 0.0
        %1587 = vmatpush1.msra.mxu0 %v1447
        %1588 = vmatprep.subr.mxu0 0.0
        %1589 = vmatpush1.msra.mxu0 %v1446
        %1590 = vmatprep.subr.mxu0 0.0
        %1591 = vmatpush1.msra.mxu0 %v1445
        %1592 = vmatprep.subr.mxu0 0.0
        %1593 = vmatpush1.msra.mxu0 %v1444
        %1594 = vmatprep.subr.mxu0 0.0
        %1595 = vmatpush1.msra.mxu0 %v1443
        %1596 = vmatprep.subr.mxu0 0.0
        %1597 = vmatpush1.msra.mxu0 %v1442
        %1598 = vmatprep.subr.mxu0 0.0
        %1599 = vmatpush1.msra.mxu0 %v1441
        %1600 = vmatprep.subr.mxu0 0.0
        %1601 = vmatpush1.msra.mxu0 %v1440
        %1602 = vmatprep.subr.mxu0 0.0
        %1603 = vmatpush1.msra.mxu0 %v1439
        %1604 = vmatprep.subr.mxu0 0.0
        %1605 = vmatpush1.msra.mxu0 %v1438
        %1606 = vmatprep.subr.mxu0 0.0
        %1607 = vmatpush1.msra.mxu0 %v1437
        %1608 = vmatprep.subr.mxu0 0.0
        %1609 = vmatpush2.msra.mxu0 0.0
        %1610 = vmatprep.subr.mxu0 0.0
        %1611 = vmatpush2.msra.mxu0 0.0
        %1612 = vmatprep.subr.mxu0 0.0
        %1613 = vmatpush2.msra.mxu0 0.0
        %1614 = vmatprep.subr.mxu0 0.0
        %1615 = vmatpush2.msra.mxu0 0.0
        %1616 = vmatprep.subr.mxu0 0.0
        %1617 = vmatpush2.msra.mxu0 0.0
        %1618 = vmatprep.subr.mxu0 0.0
        %1619 = vmatpush2.msra.mxu0 0.0
        %1620 = vmatprep.subr.mxu0 0.0
        %1621 = vmatpush2.msra.mxu0 0.0
        %1622 = vmatprep.subr.mxu0 0.0
        %1623 = vmatpush2.msra.mxu0 0.0
        %1624 = vmatprep.subr.mxu0 0.0
        %1625 = vmatpush2.msra.mxu0 0.0
        %1626 = vmatprep.subr.mxu0 0.0
        %1627 = vmatpush2.msra.mxu0 0.0
        %1628 = vmatprep.subr.mxu0 0.0
        %1629 = vmatpush2.msra.mxu0 0.0
        %1630 = vmatprep.subr.mxu0 0.0
        %1631 = vmatpush2.msra.mxu0 0.0
        %1632 = vmatprep.subr.mxu0 0.0
        %1633 = vmatpush2.msra.mxu0 0.0
        %1634 = vmatprep.subr.mxu0 0.0
        %1635 = vmatpush2.msra.mxu0 0.0
        %1636 = vmatprep.subr.mxu0 0.0
        %1637 = vmatpush2.msra.mxu0 0.0
        %1638 = vmatprep.subr.mxu0 0.0
        %1639 = vmatpush2.msra.mxu0 0.0
        %1640 = vmatprep.mubr.f32.mxu0 0.0
        %1641 = vmatmul.mubr.f32.gmra.mxu0 %v1494
        %v1642 = vpop.f32.mrf.mxu0
        %v1643 = vadd.f32 %v1568, %v1642
        %v1644 = vpop.f32.mrf.mxu0
        %1645 = vmatprep.mubr.f32.mxu0 0.0
        %1646 = vmatmul.mubr.f32.gmra.mxu0 %v1491
        %v1647 = vpop.f32.mrf.mxu0
        %v1648 = vadd.f32 %v1573, %v1647
        %v1649 = vpop.f32.mrf.mxu0
        %1650 = vdwg.mxu0
        %1651 = vmatprep.subr.mxu0 0.0
        %1652 = vmatpush1.msra.mxu0 %v1484
        %1653 = vmatprep.subr.mxu0 0.0
        %1654 = vmatpush1.msra.mxu0 %v1483
        %1655 = vmatprep.subr.mxu0 0.0
        %1656 = vmatpush1.msra.mxu0 %v1482
        %1657 = vmatprep.subr.mxu0 0.0
        %1658 = vmatpush1.msra.mxu0 %v1481
        %1659 = vmatprep.subr.mxu0 0.0
        %1660 = vmatpush1.msra.mxu0 %v1480
        %1661 = vmatprep.subr.mxu0 0.0
        %1662 = vmatpush1.msra.mxu0 %v1479
        %1663 = vmatprep.subr.mxu0 0.0
        %1664 = vmatpush1.msra.mxu0 %v1478
        %1665 = vmatprep.subr.mxu0 0.0
        %1666 = vmatpush1.msra.mxu0 %v1477
        %1667 = vmatprep.subr.mxu0 0.0
        %1668 = vmatpush1.msra.mxu0 %v1476
        %1669 = vmatprep.subr.mxu0 0.0
        %1670 = vmatpush1.msra.mxu0 %v1475
        %1671 = vmatprep.subr.mxu0 0.0
        %1672 = vmatpush1.msra.mxu0 %v1474
        %1673 = vmatprep.subr.mxu0 0.0
        %1674 = vmatpush1.msra.mxu0 %v1473
        %1675 = vmatprep.subr.mxu0 0.0
        %1676 = vmatpush1.msra.mxu0 %v1472
        %1677 = vmatprep.subr.mxu0 0.0
        %1678 = vmatpush1.msra.mxu0 %v1471
        %1679 = vmatprep.subr.mxu0 0.0
        %1680 = vmatpush1.msra.mxu0 %v1470
        %1681 = vmatprep.subr.mxu0 0.0
        %1682 = vmatpush1.msra.mxu0 %v1469
        %1683 = vmatprep.subr.mxu0 0.0
        %1684 = vmatpush2.msra.mxu0 0.0
        %1685 = vmatprep.subr.mxu0 0.0
        %1686 = vmatpush2.msra.mxu0 0.0
        %1687 = vmatprep.subr.mxu0 0.0
        %1688 = vmatpush2.msra.mxu0 0.0
        %1689 = vmatprep.subr.mxu0 0.0
        %1690 = vmatpush2.msra.mxu0 0.0
        %1691 = vmatprep.subr.mxu0 0.0
        %1692 = vmatpush2.msra.mxu0 0.0
        %1693 = vmatprep.subr.mxu0 0.0
        %1694 = vmatpush2.msra.mxu0 0.0
        %1695 = vmatprep.subr.mxu0 0.0
        %1696 = vmatpush2.msra.mxu0 0.0
        %1697 = vmatprep.subr.mxu0 0.0
        %1698 = vmatpush2.msra.mxu0 0.0
        %1699 = vmatprep.subr.mxu0 0.0
        %1700 = vmatpush2.msra.mxu0 0.0
        %1701 = vmatprep.subr.mxu0 0.0
        %1702 = vmatpush2.msra.mxu0 0.0
        %1703 = vmatprep.subr.mxu0 0.0
        %1704 = vmatpush2.msra.mxu0 0.0
        %1705 = vmatprep.subr.mxu0 0.0
        %1706 = vmatpush2.msra.mxu0 0.0
        %1707 = vmatprep.subr.mxu0 0.0
        %1708 = vmatpush2.msra.mxu0 0.0
        %1709 = vmatprep.subr.mxu0 0.0
        %1710 = vmatpush2.msra.mxu0 0.0
        %1711 = vmatprep.subr.mxu0 0.0
        %1712 = vmatpush2.msra.mxu0 0.0
        %1713 = vmatprep.subr.mxu0 0.0
        %1714 = vmatpush2.msra.mxu0 0.0
        %1715 = vmatprep.mubr.f32.mxu0 0.0
        %1716 = vmatmul.mubr.f32.gmra.mxu0 %v1497
        %v1717 = vpop.f32.mrf.mxu0
        %v1718 = vadd.f32 0.0, %v1717
        %v1719 = vpop.f32.mrf.mxu0
        %1720 = vmatprep.mubr.f32.mxu0 0.0
        %1721 = vmatmul.mubr.f32.gmra.mxu0 %v1500
        %v1722 = vpop.f32.mrf.mxu0
        %v1723 = vadd.f32 0.0, %v1722
        %v1724 = vpop.f32.mrf.mxu0
        %1725 = vdwg.mxu0
        %v1726 = vadd.f32 %v1643, %v1718
        %v1727 = vadd.f32 %v1648, %v1723
        %v1729 = vlaneseq
        %v1730 = vshrl.u32 %v1729, 7
        %v1731 = vsub.s32 0, %v1730
        %v1732 = vrot.slane %v1486, %v1731
        %v1734 = vadd.f32 %v1726, %v1732
        %v1735 = vadd.f32 %v1727, %v1732
        %v1736 = vadd.f32 %v1734, %v1434
        %v1737 = vadd.f32 %v1735, %v1435
        %v1738 = vtanh.pop %v1736
        %v1739 = vtanh.pop %v1737
        %1740 = vst [vmem:[%s217] sm:$0xff] %v1738
        %1741 = vst [vmem:[%s217 + $0x8] sm:$0xff] %v1739
        %s1742 = sand.u32 %s97, 1
        %s1743 = scalar_lea.sflag [#allocation4], %s1742
        %s1744 = sand.u32 %s97, 1
        %s1745 = smul.addr %s1744, 16
        %s1746 = scalar_lea.vmem [#allocation8], %s1745
        // Predicated region
        $region45: #{tpu_custom_call.1} parent=31 // pred_check
          %p1747 = pneg %p107
        $region46: #{tpu_custom_call.1} parent=31 // pred_check_branch
          %1749 = sbr.rel (%p1747) target = $region48
        $region47: #{tpu_custom_call.1} parent=31 // pred_region
          %s1751 = ssub.s32 256, 256
          %1752 = vsyncadd %s1743, %s1751
          %s1753 = smul.addr %s21, 2
          %s1754 = smul.addr %s1753, 128
          %s1755 = scalar_lea.hbm %s3, %s1754
          %s1756 = sshll.u32 %s1746, 4
          %s1757 = int_to_ptr.vmem [resolvable:$true] %s1756
          %1762 = dma.vmem_to_hbm [thread:$0]  %s1757, 256, %s1755, %s1743, 128, 128, 8
        $region48: #{tpu_custom_call.1} parent=31 // pred_fallthru
          _
      $region32: #{tpu_custom_call.1} parent=5 // pred_fallthru
        _
      %p1763 = scmp.le.s32.totalorder 2, %s16
      // Predicated region
      $region49: #{tpu_custom_call.1} parent=5 // pred_check
        %p1764 = pneg %p1763
      $region50: #{tpu_custom_call.1} parent=5 // pred_check_branch
        %1766 = sbr.rel (%p1764) target = $region52
      $region51: #{tpu_custom_call.1} parent=5 // pred_region
        %s1767 = ssub.s32 %s16, 2
        // Predicated region
        $region53: #{tpu_custom_call.1} parent=51 // pred_check
          %p1768 = pneg %p113
        $region54: #{tpu_custom_call.1} parent=51 // pred_check_branch
          %1770 = sbr.rel (%p1768) target = $region56
        $region55: #{tpu_custom_call.1} parent=51 // pred_region
          %s1771 = sand.u32 %s98, 1
          %s1772 = scalar_lea.sflag [#allocation4], %s1771
          %s1773 = sand.u32 %s98, 1
          %s1774 = smul.addr %s1773, 16
          %s1775 = scalar_lea.vmem [#allocation8], %s1774
          %1776 = dma.done %s1772, 256
        $region56: #{tpu_custom_call.1} parent=51 // pred_fallthru
          _
      $region52: #{tpu_custom_call.1} parent=5 // pred_fallthru
        _
    $region6: #{tpu_custom_call.1} parent=1 // loop_footer
      %s20 = sadd.s32 1, %s16
    $region7: #{tpu_custom_call.1} parent=1 // loop_footer_branch
      %15 = sbr.rel target = $region3
    $region8: #{tpu_custom_call.1} parent=1 // loop_exit
      _
    %1777 = vsyncpa [#allocation3], 1
    %s1778 = scalar_lea.sflag [#allocation3], 1
    %1779 = vsyncpa %s1778, 1
    %1780 = vsyncpa [#allocation6], 1
    %1781 = vsyncpa [#allocation4], 1
    %s1782 = scalar_lea.sflag [#allocation4], 1
    %1783 = vsyncpa %s1782, 1

</llo_original>
